<compile_context>
chip_gen: v6e
topology: v6e:2x2x1
jax: 0.10.0
libtpu: 0.0.40
codegen_flags: <defaults>
</compile_context>

<pallas_src>
from functools import partial

import jax
import jax.numpy as jnp
from jax.experimental import pallas as pl
from jax.experimental.pallas import tpu as pltpu

DIMS = [6, 512, 256, 128, 64, 32, 1]   # 6 Linear layers
N_BN = 5                                # BatchNorm after the first 5 activations
LEAKY_SLOPE = 0.1
BN_EPS = 1e-5
F_PAD = 8                               # layer-1 input features padded 6 -> 8


def _round_up(n, m):
    return ((n + m - 1) // m) * m


def _device_kind():
    try:
        return jax.devices()[0].device_kind.lower()
    except Exception:
        return ""


def _has_bf16_vpu(kind):
    # bf16 elementwise only on v6e / v7x (v5e has no bf16 VPU).
    return ("v6" in kind) or ("v7" in kind) or ("tpu7" in kind)


def _is_v7(kind):
    return ("v7" in kind) or ("tpu7" in kind)


# ----------------------------------------------------------------------------
# Kernel (feature-major: activations are (features, tb))
# ----------------------------------------------------------------------------
def envnet_kernel(x_ref,
                  w1, b1, w2, b2, w3, b3, w4, b4, w5, b5, w6, b6,
                  out_ref, *, bf16_elementwise):
    ws = (w1, w2, w3, w4, w5, w6)
    bs = (b1, b2, b3, b4, b5, b6)

    h = x_ref[...]                                           # (8, tb) bf16
    for i in range(5):
        # (out_i, in_i) @ (in_i, tb) on the MXU, f32 accumulation.
        z = jnp.dot(ws[i][...], h, preferred_element_type=jnp.float32)
        if bf16_elementwise:
            zb = z.astype(jnp.bfloat16) + bs[i][...].astype(jnp.bfloat16)
            h = jnp.where(zb > 0, zb, LEAKY_SLOPE * zb)       # stays bf16
        else:
            zf = z + bs[i][...]
            h = jnp.where(zf > 0, zf, LEAKY_SLOPE * zf).astype(jnp.bfloat16)
    # Final layer in f32; output block is (1, tb) -> lane-dense store.
    z = jnp.dot(ws[5][...], h, preferred_element_type=jnp.float32) + bs[5][...]
    out_ref[...] = z.astype(out_ref.dtype)


# ----------------------------------------------------------------------------
# Parameters: raw (PyTorch-like, f32) + folded kernel params (bf16 weights)
# ----------------------------------------------------------------------------
def make_params(key):
    keys = jax.random.split(key, 6 * 2 + N_BN * 4)
    ki = 0
    raw = {"w": [], "b": [], "gamma": [], "beta": [], "mean": [], "var": []}
    for li in range(6):
        fan_in, fan_out = DIMS[li], DIMS[li + 1]
        bound = 1.0 / (fan_in ** 0.5)
        w = jax.random.uniform(keys[ki], (fan_out, fan_in), jnp.float32, -bound, bound); ki += 1
        b = jax.random.uniform(keys[ki], (fan_out,), jnp.float32, -bound, bound); ki += 1
        raw["w"].append(w); raw["b"].append(b)
    for bi in range(N_BN):
        feat = DIMS[bi + 1]
        raw["gamma"].append(1.0 + 0.1 * jax.random.normal(keys[ki], (feat,), jnp.float32)); ki += 1
        raw["beta"].append(0.1 * jax.random.normal(keys[ki], (feat,), jnp.float32)); ki += 1
        raw["mean"].append(0.1 * jax.random.normal(keys[ki], (feat,), jnp.float32)); ki += 1
        raw["var"].append(jnp.abs(jax.random.normal(keys[ki], (feat,), jnp.float32)) + 0.5); ki += 1

    # Eval-mode BN: y = a*s + t with s = gamma/sqrt(var+eps), t = beta - mean*s.
    # Module order is Linear -> LeakyReLU -> BN -> Dropout -> Linear, so fold into the
    # NEXT Linear:  (a*s + t) @ W^T + b  ==  a @ (W * s)^T + (W @ t + b).
    ws = list(raw["w"])
    bs = list(raw["b"])
    for bi in range(N_BN):
        s = raw["gamma"][bi] / jnp.sqrt(raw["var"][bi] + BN_EPS)
        t = raw["beta"][bi] - raw["mean"][bi] * s
        bs[bi + 1] = bs[bi + 1] + ws[bi + 1] @ t      # uses the original W_{next}
        ws[bi + 1] = ws[bi + 1] * s[None, :]          # scale input columns of W_{next}

    # Pad layer-1 input features 6 -> 8 with zero columns (clean sublane tile).
    ws[0] = jnp.pad(ws[0], ((0, 0), (0, F_PAD - DIMS[0])))

    kparams = {}
    for li in range(6):
        kparams[f"w{li + 1}"] = ws[li].astype(jnp.bfloat16)   # (out, in) bf16 MXU operand
        kparams[f"b{li + 1}"] = bs[li].reshape(-1, 1)          # (out, 1) f32
    return kparams, raw


# ----------------------------------------------------------------------------
# Wrapper
# ----------------------------------------------------------------------------
def envnet_forward(x, params, *, tb=512, bf16_elementwise=None, core_parallel=None):
    B, F = x.shape
    assert F == DIMS[0]

    kind = _device_kind()
    if bf16_elementwise is None:
        bf16_elementwise = _has_bf16_vpu(kind)
    if core_parallel is None:
        core_parallel = _is_v7(kind)

    tb = min(tb, _round_up(B, 8))
    Bp = _round_up(B, tb)
    num_tiles = Bp // tb
    if num_tiles > 1:
        assert tb % 128 == 0, "multi-tile batch requires tb to be a multiple of 128"

    # Feature-major, lane-dense, bf16 input: (8, Bp), zero-padded features and batch.
    xt = jnp.pad(x.astype(jnp.bfloat16).T, ((0, F_PAD - F), (0, Bp - B)))

    order = [f"{k}{i}" for i in range(1, 7) for k in ("w", "b")]
    args = [xt] + [params[name] for name in order]

    def const_spec(arr):
        # Full-shape block, constant index_map -> resident in VMEM across grid steps.
        return pl.BlockSpec(arr.shape, lambda i: (0, 0))

    in_specs = [pl.BlockSpec((F_PAD, tb), lambda i: (0, i))] + \
               [const_spec(params[name]) for name in order]
    out_spec = pl.BlockSpec((1, tb), lambda i: (0, i))      # lane-dense output block

    flops = 2 * Bp * sum(DIMS[i] * DIMS[i + 1] for i in range(6))
    param_bytes = sum(int(params[n].size) * params[n].dtype.itemsize for n in order)
    bytes_accessed = int(xt.size) * xt.dtype.itemsize + Bp * 4 + param_bytes

    sem = pltpu.PARALLEL
    if core_parallel and num_tiles >= 2:
        # Real 2-TensorCore split of the batch grid on v7x; PARALLEL elsewhere.
        sem = getattr(pltpu, "CORE_PARALLEL", pltpu.PARALLEL)

    out = pl.pallas_call(
        partial(envnet_kernel, bf16_elementwise=bf16_elementwise),
        out_shape=jax.ShapeDtypeStruct((1, Bp), jnp.float32),
        grid=(num_tiles,),
        in_specs=in_specs,
        out_specs=out_spec,
        compiler_params=pltpu.CompilerParams(dimension_semantics=(sem,)),
        cost_estimate=pl.CostEstimate(flops=flops, transcendentals=0,
                                      bytes_accessed=bytes_accessed),
    )(*args)
    return out[0, :B].reshape(B, 1)


# ----------------------------------------------------------------------------
# References
# ----------------------------------------------------------------------------
def envnet_reference_kernel_math(x, kparams, *, bf16_elementwise):
    """Pure-JAX mirror of the exact kernel math (folded BN, bf16 matmuls)."""
    h = jnp.pad(x.astype(jnp.bfloat16), ((0, 0), (0, F_PAD - DIMS[0])))   # (B, 8)
    for i in range(6):
        w = kparams[f"w{i + 1}"]           # (out, in) bf16
        b = kparams[f"b{i + 1}"][:, 0]     # (out,)    f32
        z = jnp.dot(h, w.T, preferred_element_type=jnp.float32)
        if i == 5:
            return z + b
        if bf16_elementwise:
            zb = z.astype(jnp.bfloat16) + b.astype(jnp.bfloat16)
            h = jnp.where(zb > 0, zb, LEAKY_SLOPE * zb)
        else:
            zf = z + b
            h = jnp.where(zf > 0, zf, LEAKY_SLOPE * zf).astype(jnp.bfloat16)


def envnet_reference_f32(x, raw):
    """Independent f32 reference: explicit eval-mode BatchNorm, no folding, no bf16."""
    h = x
    for i in range(6):
        h = h @ raw["w"][i].T + raw["b"][i]
        if i < 5:
            h = jnp.where(h > 0, h, LEAKY_SLOPE * h)
            s = raw["gamma"][i] / jnp.sqrt(raw["var"][i] + BN_EPS)
            h = (h - raw["mean"][i]) * s + raw["beta"][i]
            # Dropout: identity in eval mode.
    return h


if __name__ == "__main__":
    key = jax.random.PRNGKey(0)
    pkey, xkey = jax.random.split(key)
    kparams, raw = make_params(pkey)

    B = 16  # small batch
    x = jax.random.normal(xkey, (B, DIMS[0]), jnp.float32)

    kind = _device_kind()
    bf16_ew = _has_bf16_vpu(kind)

    out = jax.block_until_ready(envnet_forward(x, kparams, bf16_elementwise=bf16_ew))
    assert out.shape == (B, 1), out.shape

    # 1) Tight check vs a pure-JAX mirror of the exact kernel math.
    ref_k = envnet_reference_kernel_math(x, kparams, bf16_elementwise=bf16_ew)
    err_k = float(jnp.max(jnp.abs(out - ref_k)))
    assert jnp.allclose(out, ref_k, atol=5e-3, rtol=5e-3), f"kernel-math max abs err {err_k}"

    # 2) Independent f32 reference with explicit (unfolded) eval-mode BatchNorm;
    #    tolerance accounts for bf16 weights/activations.
    ref_f = envnet_reference_f32(x, raw)
    err_f = float(jnp.max(jnp.abs(out - ref_f)))
    assert jnp.allclose(out, ref_f, atol=5e-2, rtol=5e-2), f"f32 reference max abs err {err_f}"

    print("KERNEL_OK")
</pallas_src>

<mosaic_0001>
module attributes {stable_mosaic.version = 11 : i64} {
  func.func @envnet_kernel(%arg0: i32, %arg1: memref<8x16xbf16, #tpu.memory_space<vmem>>, %arg2: memref<512x8xbf16, #tpu.memory_space<vmem>>, %arg3: memref<512x1xf32, #tpu.memory_space<vmem>>, %arg4: memref<256x512xbf16, #tpu.memory_space<vmem>>, %arg5: memref<256x1xf32, #tpu.memory_space<vmem>>, %arg6: memref<128x256xbf16, #tpu.memory_space<vmem>>, %arg7: memref<128x1xf32, #tpu.memory_space<vmem>>, %arg8: memref<64x128xbf16, #tpu.memory_space<vmem>>, %arg9: memref<64x1xf32, #tpu.memory_space<vmem>>, %arg10: memref<32x64xbf16, #tpu.memory_space<vmem>>, %arg11: memref<32x1xf32, #tpu.memory_space<vmem>>, %arg12: memref<1x32xbf16, #tpu.memory_space<vmem>>, %arg13: memref<1x1xf32, #tpu.memory_space<vmem>>, %arg14: memref<1x16xf32, #tpu.memory_space<vmem>>) attributes {dimension_semantics = [#tpu.dimension_semantics<parallel>], iteration_bounds = array<i64: 1>, scalar_prefetch = 0 : i64, scratch_operands = 0 : i64, tpu.core_type = #tpu.core_type<tc>, window_params = [{transform_indices = @transform_0, window_bounds = array<i64: 8, 16>}, {pipeline_mode = #tpu.pipeline_mode<synchronous>, transform_indices = @transform_1, window_bounds = array<i64: 512, 8>}, {pipeline_mode = #tpu.pipeline_mode<synchronous>, transform_indices = @transform_2, window_bounds = array<i64: 512, 1>}, {pipeline_mode = #tpu.pipeline_mode<synchronous>, transform_indices = @transform_3, window_bounds = array<i64: 256, 512>}, {pipeline_mode = #tpu.pipeline_mode<synchronous>, transform_indices = @transform_4, window_bounds = array<i64: 256, 1>}, {pipeline_mode = #tpu.pipeline_mode<synchronous>, transform_indices = @transform_5, window_bounds = array<i64: 128, 256>}, {pipeline_mode = #tpu.pipeline_mode<synchronous>, transform_indices = @transform_6, window_bounds = array<i64: 128, 1>}, {pipeline_mode = #tpu.pipeline_mode<synchronous>, transform_indices = @transform_7, window_bounds = array<i64: 64, 128>}, {pipeline_mode = #tpu.pipeline_mode<synchronous>, transform_indices = @transform_8, window_bounds = array<i64: 64, 1>}, {pipeline_mode = #tpu.pipeline_mode<synchronous>, transform_indices = @transform_9, window_bounds = array<i64: 32, 64>}, {pipeline_mode = #tpu.pipeline_mode<synchronous>, transform_indices = @transform_10, window_bounds = array<i64: 32, 1>}, {pipeline_mode = #tpu.pipeline_mode<synchronous>, transform_indices = @transform_11, window_bounds = array<i64: 1, 32>}, {pipeline_mode = #tpu.pipeline_mode<synchronous>, transform_indices = @transform_12, window_bounds = array<i64: 1, 1>}, {transform_indices = @transform_13, window_bounds = array<i64: 1, 16>}]} {
    %c0 = arith.constant 0 : index
    %c0_0 = arith.constant 0 : index
    %0 = vector.load %arg1[%c0, %c0_0] : memref<8x16xbf16, #tpu.memory_space<vmem>>, vector<8x16xbf16>
    %c0_1 = arith.constant 0 : index
    %c0_2 = arith.constant 0 : index
    %1 = vector.load %arg2[%c0_1, %c0_2] : memref<512x8xbf16, #tpu.memory_space<vmem>>, vector<512x8xbf16>
    %cst = arith.constant dense<0.000000e+00> : vector<512x16xf32>
    %2 = tpu.matmul %1, %0, %cst {dimension_numbers = #tpu.dot_dimension_numbers<[1], [0], [0], [1], [0, 0, 1, 1], [], []>} : vector<512x8xbf16>, vector<8x16xbf16>, vector<512x16xf32> -> vector<512x16xf32>
    %c0_3 = arith.constant 0 : index
    %c0_4 = arith.constant 0 : index
    %3 = vector.load %arg3[%c0_3, %c0_4] : memref<512x1xf32, #tpu.memory_space<vmem>>, vector<512x1xf32>
    %4 = vector.broadcast %3 : vector<512x1xf32> to vector<512x16xf32>
    %5 = arith.addf %2, %4 : vector<512x16xf32>
    %cst_5 = arith.constant 0.000000e+00 : f32
    %6 = vector.broadcast %cst_5 : f32 to vector<512x16xf32>
    %7 = arith.cmpf ogt, %5, %6 : vector<512x16xf32>
    %cst_6 = arith.constant 1.000000e-01 : f32
    %8 = vector.broadcast %cst_6 : f32 to vector<512x16xf32>
    %9 = arith.mulf %8, %5 : vector<512x16xf32>
    %10 = arith.select %7, %5, %9 : vector<512x16xi1>, vector<512x16xf32>
    %11 = arith.truncf %10 : vector<512x16xf32> to vector<512x16xbf16>
    %c0_7 = arith.constant 0 : index
    %c0_8 = arith.constant 0 : index
    %12 = vector.load %arg4[%c0_7, %c0_8] : memref<256x512xbf16, #tpu.memory_space<vmem>>, vector<256x512xbf16>
    %cst_9 = arith.constant dense<0.000000e+00> : vector<256x16xf32>
    %13 = tpu.matmul %12, %11, %cst_9 {dimension_numbers = #tpu.dot_dimension_numbers<[1], [0], [0], [1], [0, 0, 1, 1], [], []>} : vector<256x512xbf16>, vector<512x16xbf16>, vector<256x16xf32> -> vector<256x16xf32>
    %c0_10 = arith.constant 0 : index
    %c0_11 = arith.constant 0 : index
    %14 = vector.load %arg5[%c0_10, %c0_11] : memref<256x1xf32, #tpu.memory_space<vmem>>, vector<256x1xf32>
    %15 = vector.broadcast %14 : vector<256x1xf32> to vector<256x16xf32>
    %16 = arith.addf %13, %15 : vector<256x16xf32>
    %cst_12 = arith.constant 0.000000e+00 : f32
    %17 = vector.broadcast %cst_12 : f32 to vector<256x16xf32>
    %18 = arith.cmpf ogt, %16, %17 : vector<256x16xf32>
    %cst_13 = arith.constant 1.000000e-01 : f32
    %19 = vector.broadcast %cst_13 : f32 to vector<256x16xf32>
    %20 = arith.mulf %19, %16 : vector<256x16xf32>
    %21 = arith.select %18, %16, %20 : vector<256x16xi1>, vector<256x16xf32>
    %22 = arith.truncf %21 : vector<256x16xf32> to vector<256x16xbf16>
    %c0_14 = arith.constant 0 : index
    %c0_15 = arith.constant 0 : index
    %23 = vector.load %arg6[%c0_14, %c0_15] : memref<128x256xbf16, #tpu.memory_space<vmem>>, vector<128x256xbf16>
    %cst_16 = arith.constant dense<0.000000e+00> : vector<128x16xf32>
    %24 = tpu.matmul %23, %22, %cst_16 {dimension_numbers = #tpu.dot_dimension_numbers<[1], [0], [0], [1], [0, 0, 1, 1], [], []>} : vector<128x256xbf16>, vector<256x16xbf16>, vector<128x16xf32> -> vector<128x16xf32>
    %c0_17 = arith.constant 0 : index
    %c0_18 = arith.constant 0 : index
    %25 = vector.load %arg7[%c0_17, %c0_18] : memref<128x1xf32, #tpu.memory_space<vmem>>, vector<128x1xf32>
    %26 = vector.broadcast %25 : vector<128x1xf32> to vector<128x16xf32>
    %27 = arith.addf %24, %26 : vector<128x16xf32>
    %cst_19 = arith.constant 0.000000e+00 : f32
    %28 = vector.broadcast %cst_19 : f32 to vector<128x16xf32>
    %29 = arith.cmpf ogt, %27, %28 : vector<128x16xf32>
    %cst_20 = arith.constant 1.000000e-01 : f32
    %30 = vector.broadcast %cst_20 : f32 to vector<128x16xf32>
    %31 = arith.mulf %30, %27 : vector<128x16xf32>
    %32 = arith.select %29, %27, %31 : vector<128x16xi1>, vector<128x16xf32>
    %33 = arith.truncf %32 : vector<128x16xf32> to vector<128x16xbf16>
    %c0_21 = arith.constant 0 : index
    %c0_22 = arith.constant 0 : index
    %34 = vector.load %arg8[%c0_21, %c0_22] : memref<64x128xbf16, #tpu.memory_space<vmem>>, vector<64x128xbf16>
    %cst_23 = arith.constant dense<0.000000e+00> : vector<64x16xf32>
    %35 = tpu.matmul %34, %33, %cst_23 {dimension_numbers = #tpu.dot_dimension_numbers<[1], [0], [0], [1], [0, 0, 1, 1], [], []>} : vector<64x128xbf16>, vector<128x16xbf16>, vector<64x16xf32> -> vector<64x16xf32>
    %c0_24 = arith.constant 0 : index
    %c0_25 = arith.constant 0 : index
    %36 = vector.load %arg9[%c0_24, %c0_25] : memref<64x1xf32, #tpu.memory_space<vmem>>, vector<64x1xf32>
    %37 = vector.broadcast %36 : vector<64x1xf32> to vector<64x16xf32>
    %38 = arith.addf %35, %37 : vector<64x16xf32>
    %cst_26 = arith.constant 0.000000e+00 : f32
    %39 = vector.broadcast %cst_26 : f32 to vector<64x16xf32>
    %40 = arith.cmpf ogt, %38, %39 : vector<64x16xf32>
    %cst_27 = arith.constant 1.000000e-01 : f32
    %41 = vector.broadcast %cst_27 : f32 to vector<64x16xf32>
    %42 = arith.mulf %41, %38 : vector<64x16xf32>
    %43 = arith.select %40, %38, %42 : vector<64x16xi1>, vector<64x16xf32>
    %44 = arith.truncf %43 : vector<64x16xf32> to vector<64x16xbf16>
    %c0_28 = arith.constant 0 : index
    %c0_29 = arith.constant 0 : index
    %45 = vector.load %arg10[%c0_28, %c0_29] : memref<32x64xbf16, #tpu.memory_space<vmem>>, vector<32x64xbf16>
    %cst_30 = arith.constant dense<0.000000e+00> : vector<32x16xf32>
    %46 = tpu.matmul %45, %44, %cst_30 {dimension_numbers = #tpu.dot_dimension_numbers<[1], [0], [0], [1], [0, 0, 1, 1], [], []>} : vector<32x64xbf16>, vector<64x16xbf16>, vector<32x16xf32> -> vector<32x16xf32>
    %c0_31 = arith.constant 0 : index
    %c0_32 = arith.constant 0 : index
    %47 = vector.load %arg11[%c0_31, %c0_32] : memref<32x1xf32, #tpu.memory_space<vmem>>, vector<32x1xf32>
    %48 = vector.broadcast %47 : vector<32x1xf32> to vector<32x16xf32>
    %49 = arith.addf %46, %48 : vector<32x16xf32>
    %cst_33 = arith.constant 0.000000e+00 : f32
    %50 = vector.broadcast %cst_33 : f32 to vector<32x16xf32>
    %51 = arith.cmpf ogt, %49, %50 : vector<32x16xf32>
    %cst_34 = arith.constant 1.000000e-01 : f32
    %52 = vector.broadcast %cst_34 : f32 to vector<32x16xf32>
    %53 = arith.mulf %52, %49 : vector<32x16xf32>
    %54 = arith.select %51, %49, %53 : vector<32x16xi1>, vector<32x16xf32>
    %55 = arith.truncf %54 : vector<32x16xf32> to vector<32x16xbf16>
    %c0_35 = arith.constant 0 : index
    %c0_36 = arith.constant 0 : index
    %56 = vector.load %arg12[%c0_35, %c0_36] : memref<1x32xbf16, #tpu.memory_space<vmem>>, vector<1x32xbf16>
    %cst_37 = arith.constant dense<0.000000e+00> : vector<1x16xf32>
    %57 = tpu.matmul %56, %55, %cst_37 {dimension_numbers = #tpu.dot_dimension_numbers<[1], [0], [0], [1], [0, 0, 1, 1], [], []>} : vector<1x32xbf16>, vector<32x16xbf16>, vector<1x16xf32> -> vector<1x16xf32>
    %c0_38 = arith.constant 0 : index
    %c0_39 = arith.constant 0 : index
    %58 = vector.load %arg13[%c0_38, %c0_39] : memref<1x1xf32, #tpu.memory_space<vmem>>, vector<1x1xf32>
    %59 = vector.broadcast %58 : vector<1x1xf32> to vector<1x16xf32>
    %60 = arith.addf %57, %59 : vector<1x16xf32>
    %c0_40 = arith.constant 0 : index
    %c0_41 = arith.constant 0 : index
    %61 = vector.load %arg14[%c0_40, %c0_41] : memref<1x16xf32, #tpu.memory_space<vmem>>, vector<1x16xf32>
    tpu.vector_store %arg14[%c0_40, %c0_41], %60 {strides = array<i32>} : memref<1x16xf32, #tpu.memory_space<vmem>>, vector<1x16xf32>,
    return
  }
  func.func @transform_0(%arg0: i32) -> (i32, i32) {
    %c0_i32 = arith.constant 0 : i32
    %c0_i32_0 = arith.constant 0 : i32
    return %c0_i32, %arg0 : i32, i32
  }
  func.func @transform_1(%arg0: i32) -> (i32, i32) {
    %c0_i32 = arith.constant 0 : i32
    %c0_i32_0 = arith.constant 0 : i32
    %c0_i32_1 = arith.constant 0 : i32
    return %c0_i32, %c0_i32_0 : i32, i32
  }
  func.func @transform_2(%arg0: i32) -> (i32, i32) {
    %c0_i32 = arith.constant 0 : i32
    %c0_i32_0 = arith.constant 0 : i32
    %c0_i32_1 = arith.constant 0 : i32
    return %c0_i32, %c0_i32_0 : i32, i32
  }
  func.func @transform_3(%arg0: i32) -> (i32, i32) {
    %c0_i32 = arith.constant 0 : i32
    %c0_i32_0 = arith.constant 0 : i32
    %c0_i32_1 = arith.constant 0 : i32
    return %c0_i32, %c0_i32_0 : i32, i32
  }
  func.func @transform_4(%arg0: i32) -> (i32, i32) {
    %c0_i32 = arith.constant 0 : i32
    %c0_i32_0 = arith.constant 0 : i32
    %c0_i32_1 = arith.constant 0 : i32
    return %c0_i32, %c0_i32_0 : i32, i32
  }
  func.func @transform_5(%arg0: i32) -> (i32, i32) {
    %c0_i32 = arith.constant 0 : i32
    %c0_i32_0 = arith.constant 0 : i32
    %c0_i32_1 = arith.constant 0 : i32
    return %c0_i32, %c0_i32_0 : i32, i32
  }
  func.func @transform_6(%arg0: i32) -> (i32, i32) {
    %c0_i32 = arith.constant 0 : i32
    %c0_i32_0 = arith.constant 0 : i32
    %c0_i32_1 = arith.constant 0 : i32
    return %c0_i32, %c0_i32_0 : i32, i32
  }
  func.func @transform_7(%arg0: i32) -> (i32, i32) {
    %c0_i32 = arith.constant 0 : i32
    %c0_i32_0 = arith.constant 0 : i32
    %c0_i32_1 = arith.constant 0 : i32
    return %c0_i32, %c0_i32_0 : i32, i32
  }
  func.func @transform_8(%arg0: i32) -> (i32, i32) {
    %c0_i32 = arith.constant 0 : i32
    %c0_i32_0 = arith.constant 0 : i32
    %c0_i32_1 = arith.constant 0 : i32
    return %c0_i32, %c0_i32_0 : i32, i32
  }
  func.func @transform_9(%arg0: i32) -> (i32, i32) {
    %c0_i32 = arith.constant 0 : i32
    %c0_i32_0 = arith.constant 0 : i32
    %c0_i32_1 = arith.constant 0 : i32
    return %c0_i32, %c0_i32_0 : i32, i32
  }
  func.func @transform_10(%arg0: i32) -> (i32, i32) {
    %c0_i32 = arith.constant 0 : i32
    %c0_i32_0 = arith.constant 0 : i32
    %c0_i32_1 = arith.constant 0 : i32
    return %c0_i32, %c0_i32_0 : i32, i32
  }
  func.func @transform_11(%arg0: i32) -> (i32, i32) {
    %c0_i32 = arith.constant 0 : i32
    %c0_i32_0 = arith.constant 0 : i32
    %c0_i32_1 = arith.constant 0 : i32
    return %c0_i32, %c0_i32_0 : i32, i32
  }
  func.func @transform_12(%arg0: i32) -> (i32, i32) {
    %c0_i32 = arith.constant 0 : i32
    %c0_i32_0 = arith.constant 0 : i32
    %c0_i32_1 = arith.constant 0 : i32
    return %c0_i32, %c0_i32_0 : i32, i32
  }
  func.func @transform_13(%arg0: i32) -> (i32, i32) {
    %c0_i32 = arith.constant 0 : i32
    %c0_i32_0 = arith.constant 0 : i32
    return %c0_i32, %arg0 : i32, i32
  }
}

</mosaic_0001>

<llo_original>
// kernel: tpu_custom_call.1
$region0: #{tpu_custom_call.1}
  #allocation0 [shape = 'u32[]', space=smem, size = 0x4, offset = 0x4, fixed_abs, tag = 'smem constant byte address 0x4 - core index']
  #allocation1 [shape = 'u32[144,128]{1,0:T(1,128)}', space=vmem, size = 0x12000, scoped, tag = 'internal scratch']
  #allocation2 [shape = 'f32[1,1]{1,0:T(1,128)S(1)}', space=vmem, size = 0x200, scoped, tag = 'scoped memory for tpu_custom_call.1']
  %s0 = inlined_call_operand.vmem [shape: bf16[8,16], index: 0, kind: input, shape index: {}]
  %s1 = inlined_call_operand.vmem [shape: bf16[512,8], index: 1, kind: input, shape index: {}]
  %s2 = inlined_call_operand.vmem [shape: f32[512,1], index: 2, kind: input, shape index: {}]
  %s3 = inlined_call_operand.vmem [shape: bf16[256,512], index: 3, kind: input, shape index: {}]
  %s4 = inlined_call_operand.vmem [shape: f32[256,1], index: 4, kind: input, shape index: {}]
  %s5 = inlined_call_operand.vmem [shape: bf16[128,256], index: 5, kind: input, shape index: {}]
  %s6 = inlined_call_operand.vmem [shape: f32[128,1], index: 6, kind: input, shape index: {}]
  %s7 = inlined_call_operand.vmem [shape: bf16[64,128], index: 7, kind: input, shape index: {}]
  %s8 = inlined_call_operand.vmem [shape: f32[64,1], index: 8, kind: input, shape index: {}]
  %s9 = inlined_call_operand.vmem [shape: bf16[32,64], index: 9, kind: input, shape index: {}]
  %s10 = inlined_call_operand.vmem [shape: f32[32,1], index: 10, kind: input, shape index: {}]
  %s11 = inlined_call_operand.vmem [shape: bf16[1,32], index: 11, kind: input, shape index: {}]
  %s12 = inlined_call_operand.<no memory space> [shape: f32[1,1], index: 12, kind: input, shape index: {}]
  %s13 = inlined_call_operand.hbm [shape: f32[1,16], index: 13, kind: output, shape index: {}]
  %s14 = sld [smem:[#allocation0]]
  $region62: #{tpu_custom_call.1} parent=0
    _
  %s16 = ssub.s32 1, %s14
  %s17 = scalar_select 0, %s16, %s14
  %v18 = vstv %s12
  %19 = vst [vmem:[#allocation2] sm:$0x1] %v18
  $region1: #{tpu_custom_call.1} parent=0
    #allocation3 [shape = 'u8[512]{0}', space=vmem, size = 0x400, scoped, tag = 'output window, operand 0, single buffered']
    #allocation4 [shape = 's32[1]{0}', space=sflag, size = 0x4, scoped, tag = 'scoped memory for tpu_custom_call.1']
    %20 = vsyncpa [#allocation4], 0
    // Predicated region
    $region2: #{tpu_custom_call.1} parent=1 // pred_check
      _
    $region3: #{tpu_custom_call.1} parent=1 // pred_check_branch
      %22 = sbr.rel (0) target = $region5
    $region4: #{tpu_custom_call.1} parent=1 // pred_region
      _
    $region5: #{tpu_custom_call.1} parent=1 // pred_fallthru
      _
    // Predicated region
    $region6: #{tpu_custom_call.1} parent=1 // pred_check
      _
    $region7: #{tpu_custom_call.1} parent=1 // pred_check_branch
      %24 = sbr.rel (0) target = $region9
    $region8: #{tpu_custom_call.1} parent=1 // pred_region
      _
    $region9: #{tpu_custom_call.1} parent=1 // pred_fallthru
      _
    // Predicated region
    $region10: #{tpu_custom_call.1} parent=1 // pred_check
      _
    $region11: #{tpu_custom_call.1} parent=1 // pred_check_branch
      %26 = sbr.rel (0) target = $region13
    $region12: #{tpu_custom_call.1} parent=1 // pred_region
      _
    $region13: #{tpu_custom_call.1} parent=1 // pred_fallthru
      _
    // Predicated region
    $region14: #{tpu_custom_call.1} parent=1 // pred_check
      _
    $region15: #{tpu_custom_call.1} parent=1 // pred_check_branch
      %28 = sbr.rel (0) target = $region17
    $region16: #{tpu_custom_call.1} parent=1 // pred_region
      _
    $region17: #{tpu_custom_call.1} parent=1 // pred_fallthru
      _
    // Predicated region
    $region18: #{tpu_custom_call.1} parent=1 // pred_check
      _
    $region19: #{tpu_custom_call.1} parent=1 // pred_check_branch
      %30 = sbr.rel (0) target = $region21
    $region20: #{tpu_custom_call.1} parent=1 // pred_region
      _
    $region21: #{tpu_custom_call.1} parent=1 // pred_fallthru
      _
    // Predicated region
    $region22: #{tpu_custom_call.1} parent=1 // pred_check
      _
    $region23: #{tpu_custom_call.1} parent=1 // pred_check_branch
      %32 = sbr.rel (0) target = $region25
    $region24: #{tpu_custom_call.1} parent=1 // pred_region
      _
    $region25: #{tpu_custom_call.1} parent=1 // pred_fallthru
      _
    // Predicated region
    $region26: #{tpu_custom_call.1} parent=1 // pred_check
      _
    $region27: #{tpu_custom_call.1} parent=1 // pred_check_branch
      %34 = sbr.rel (0) target = $region29
    $region28: #{tpu_custom_call.1} parent=1 // pred_region
      _
    $region29: #{tpu_custom_call.1} parent=1 // pred_fallthru
      _
    // Predicated region
    $region30: #{tpu_custom_call.1} parent=1 // pred_check
      _
    $region31: #{tpu_custom_call.1} parent=1 // pred_check_branch
      %36 = sbr.rel (0) target = $region33
    $region32: #{tpu_custom_call.1} parent=1 // pred_region
      _
    $region33: #{tpu_custom_call.1} parent=1 // pred_fallthru
      _
    // Predicated region
    $region34: #{tpu_custom_call.1} parent=1 // pred_check
      _
    $region35: #{tpu_custom_call.1} parent=1 // pred_check_branch
      %38 = sbr.rel (0) target = $region37
    $region36: #{tpu_custom_call.1} parent=1 // pred_region
      _
    $region37: #{tpu_custom_call.1} parent=1 // pred_fallthru
      _
    // Predicated region
    $region38: #{tpu_custom_call.1} parent=1 // pred_check
      _
    $region39: #{tpu_custom_call.1} parent=1 // pred_check_branch
      %40 = sbr.rel (0) target = $region41
    $region40: #{tpu_custom_call.1} parent=1 // pred_region
      _
    $region41: #{tpu_custom_call.1} parent=1 // pred_fallthru
      _
    // Predicated region
    $region42: #{tpu_custom_call.1} parent=1 // pred_check
      _
    $region43: #{tpu_custom_call.1} parent=1 // pred_check_branch
      %42 = sbr.rel (0) target = $region45
    $region44: #{tpu_custom_call.1} parent=1 // pred_region
      _
    $region45: #{tpu_custom_call.1} parent=1 // pred_fallthru
      _
    // Predicated region
    $region46: #{tpu_custom_call.1} parent=1 // pred_check
      _
    $region47: #{tpu_custom_call.1} parent=1 // pred_check_branch
      %44 = sbr.rel (0) target = $region49
    $region48: #{tpu_custom_call.1} parent=1 // pred_region
      _
    $region49: #{tpu_custom_call.1} parent=1 // pred_fallthru
      _
    // Predicated region
    $region50: #{tpu_custom_call.1} parent=1 // pred_check
      _
    $region51: #{tpu_custom_call.1} parent=1 // pred_check_branch
      %46 = sbr.rel (0) target = $region53
    $region52: #{tpu_custom_call.1} parent=1 // pred_region
      _
    $region53: #{tpu_custom_call.1} parent=1 // pred_fallthru
      _
    %v48 = vld [vmem:[%s0] sm:$0xf]
    %v49 = vld [vmem:[%s1] sm:$0xf]
    %v50 = vld [vmem:[%s1 + $0x4] sm:$0xf]
    %v51 = vld [vmem:[%s1 + $0x8] sm:$0xf]
    %v52 = vld [vmem:[%s1 + $0xc] sm:$0xf]
    %v53 = vld [vmem:[%s1 + $0x10] sm:$0xf]
    %v54 = vld [vmem:[%s1 + $0x14] sm:$0xf]
    %v55 = vld [vmem:[%s1 + $0x18] sm:$0xf]
    %v56 = vld [vmem:[%s1 + $0x1c] sm:$0xf]
    %v57 = vld [vmem:[%s1 + $0x20] sm:$0xf]
    %v58 = vld [vmem:[%s1 + $0x24] sm:$0xf]
    %v59 = vld [vmem:[%s1 + $0x28] sm:$0xf]
    %v60 = vld [vmem:[%s1 + $0x2c] sm:$0xf]
    %v61 = vld [vmem:[%s1 + $0x30] sm:$0xf]
    %v62 = vld [vmem:[%s1 + $0x34] sm:$0xf]
    %v63 = vld [vmem:[%s1 + $0x38] sm:$0xf]
    %v64 = vld [vmem:[%s1 + $0x3c] sm:$0xf]
    %v65 = vld [vmem:[%s1 + $0x40] sm:$0xf]
    %v66 = vld [vmem:[%s1 + $0x44] sm:$0xf]
    %v67 = vld [vmem:[%s1 + $0x48] sm:$0xf]
    %v68 = vld [vmem:[%s1 + $0x4c] sm:$0xf]
    %v69 = vld [vmem:[%s1 + $0x50] sm:$0xf]
    %v70 = vld [vmem:[%s1 + $0x54] sm:$0xf]
    %v71 = vld [vmem:[%s1 + $0x58] sm:$0xf]
    %v72 = vld [vmem:[%s1 + $0x5c] sm:$0xf]
    %v73 = vld [vmem:[%s1 + $0x60] sm:$0xf]
    %v74 = vld [vmem:[%s1 + $0x64] sm:$0xf]
    %v75 = vld [vmem:[%s1 + $0x68] sm:$0xf]
    %v76 = vld [vmem:[%s1 + $0x6c] sm:$0xf]
    %v77 = vld [vmem:[%s1 + $0x70] sm:$0xf]
    %v78 = vld [vmem:[%s1 + $0x74] sm:$0xf]
    %v79 = vld [vmem:[%s1 + $0x78] sm:$0xf]
    %v80 = vld [vmem:[%s1 + $0x7c] sm:$0xf]
    %v81 = vld [vmem:[%s1 + $0x80] sm:$0xf]
    %v82 = vld [vmem:[%s1 + $0x84] sm:$0xf]
    %v83 = vld [vmem:[%s1 + $0x88] sm:$0xf]
    %v84 = vld [vmem:[%s1 + $0x8c] sm:$0xf]
    %v85 = vld [vmem:[%s1 + $0x90] sm:$0xf]
    %v86 = vld [vmem:[%s1 + $0x94] sm:$0xf]
    %v87 = vld [vmem:[%s1 + $0x98] sm:$0xf]
    %v88 = vld [vmem:[%s1 + $0x9c] sm:$0xf]
    %v89 = vld [vmem:[%s1 + $0xa0] sm:$0xf]
    %v90 = vld [vmem:[%s1 + $0xa4] sm:$0xf]
    %v91 = vld [vmem:[%s1 + $0xa8] sm:$0xf]
    %v92 = vld [vmem:[%s1 + $0xac] sm:$0xf]
    %v93 = vld [vmem:[%s1 + $0xb0] sm:$0xf]
    %v94 = vld [vmem:[%s1 + $0xb4] sm:$0xf]
    %v95 = vld [vmem:[%s1 + $0xb8] sm:$0xf]
    %v96 = vld [vmem:[%s1 + $0xbc] sm:$0xf]
    %v97 = vld [vmem:[%s1 + $0xc0] sm:$0xf]
    %v98 = vld [vmem:[%s1 + $0xc4] sm:$0xf]
    %v99 = vld [vmem:[%s1 + $0xc8] sm:$0xf]
    %v100 = vld [vmem:[%s1 + $0xcc] sm:$0xf]
    %v101 = vld [vmem:[%s1 + $0xd0] sm:$0xf]
    %v102 = vld [vmem:[%s1 + $0xd4] sm:$0xf]
    %v103 = vld [vmem:[%s1 + $0xd8] sm:$0xf]
    %v104 = vld [vmem:[%s1 + $0xdc] sm:$0xf]
    %v105 = vld [vmem:[%s1 + $0xe0] sm:$0xf]
    %v106 = vld [vmem:[%s1 + $0xe4] sm:$0xf]
    %v107 = vld [vmem:[%s1 + $0xe8] sm:$0xf]
    %v108 = vld [vmem:[%s1 + $0xec] sm:$0xf]
    %v109 = vld [vmem:[%s1 + $0xf0] sm:$0xf]
    %v110 = vld [vmem:[%s1 + $0xf4] sm:$0xf]
    %v111 = vld [vmem:[%s1 + $0xf8] sm:$0xf]
    %v112 = vld [vmem:[%s1 + $0xfc] sm:$0xf]
    %v113 = vld [vmem:[%s2] sm:$0xff]
    %v114 = vld [vmem:[%s2 + $0x8] sm:$0xff]
    %v115 = vld [vmem:[%s2 + $0x10] sm:$0xff]
    %v116 = vld [vmem:[%s2 + $0x18] sm:$0xff]
    %v117 = vld [vmem:[%s2 + $0x20] sm:$0xff]
    %v118 = vld [vmem:[%s2 + $0x28] sm:$0xff]
    %v119 = vld [vmem:[%s2 + $0x30] sm:$0xff]
    %v120 = vld [vmem:[%s2 + $0x38] sm:$0xff]
    %v121 = vld [vmem:[%s2 + $0x40] sm:$0xff]
    %v122 = vld [vmem:[%s2 + $0x48] sm:$0xff]
    %v123 = vld [vmem:[%s2 + $0x50] sm:$0xff]
    %v124 = vld [vmem:[%s2 + $0x58] sm:$0xff]
    %v125 = vld [vmem:[%s2 + $0x60] sm:$0xff]
    %v126 = vld [vmem:[%s2 + $0x68] sm:$0xff]
    %v127 = vld [vmem:[%s2 + $0x70] sm:$0xff]
    %v128 = vld [vmem:[%s2 + $0x78] sm:$0xff]
    %v129 = vld [vmem:[%s2 + $0x80] sm:$0xff]
    %v130 = vld [vmem:[%s2 + $0x88] sm:$0xff]
    %v131 = vld [vmem:[%s2 + $0x90] sm:$0xff]
    %v132 = vld [vmem:[%s2 + $0x98] sm:$0xff]
    %v133 = vld [vmem:[%s2 + $0xa0] sm:$0xff]
    %v134 = vld [vmem:[%s2 + $0xa8] sm:$0xff]
    %v135 = vld [vmem:[%s2 + $0xb0] sm:$0xff]
    %v136 = vld [vmem:[%s2 + $0xb8] sm:$0xff]
    %v137 = vld [vmem:[%s2 + $0xc0] sm:$0xff]
    %v138 = vld [vmem:[%s2 + $0xc8] sm:$0xff]
    %v139 = vld [vmem:[%s2 + $0xd0] sm:$0xff]
    %v140 = vld [vmem:[%s2 + $0xd8] sm:$0xff]
    %v141 = vld [vmem:[%s2 + $0xe0] sm:$0xff]
    %v142 = vld [vmem:[%s2 + $0xe8] sm:$0xff]
    %v143 = vld [vmem:[%s2 + $0xf0] sm:$0xff]
    %v144 = vld [vmem:[%s2 + $0xf8] sm:$0xff]
    %v145 = vld [vmem:[%s2 + $0x100] sm:$0xff]
    %v146 = vld [vmem:[%s2 + $0x108] sm:$0xff]
    %v147 = vld [vmem:[%s2 + $0x110] sm:$0xff]
    %v148 = vld [vmem:[%s2 + $0x118] sm:$0xff]
    %v149 = vld [vmem:[%s2 + $0x120] sm:$0xff]
    %v150 = vld [vmem:[%s2 + $0x128] sm:$0xff]
    %v151 = vld [vmem:[%s2 + $0x130] sm:$0xff]
    %v152 = vld [vmem:[%s2 + $0x138] sm:$0xff]
    %v153 = vld [vmem:[%s2 + $0x140] sm:$0xff]
    %v154 = vld [vmem:[%s2 + $0x148] sm:$0xff]
    %v155 = vld [vmem:[%s2 + $0x150] sm:$0xff]
    %v156 = vld [vmem:[%s2 + $0x158] sm:$0xff]
    %v157 = vld [vmem:[%s2 + $0x160] sm:$0xff]
    %v158 = vld [vmem:[%s2 + $0x168] sm:$0xff]
    %v159 = vld [vmem:[%s2 + $0x170] sm:$0xff]
    %v160 = vld [vmem:[%s2 + $0x178] sm:$0xff]
    %v161 = vld [vmem:[%s2 + $0x180] sm:$0xff]
    %v162 = vld [vmem:[%s2 + $0x188] sm:$0xff]
    %v163 = vld [vmem:[%s2 + $0x190] sm:$0xff]
    %v164 = vld [vmem:[%s2 + $0x198] sm:$0xff]
    %v165 = vld [vmem:[%s2 + $0x1a0] sm:$0xff]
    %v166 = vld [vmem:[%s2 + $0x1a8] sm:$0xff]
    %v167 = vld [vmem:[%s2 + $0x1b0] sm:$0xff]
    %v168 = vld [vmem:[%s2 + $0x1b8] sm:$0xff]
    %v169 = vld [vmem:[%s2 + $0x1c0] sm:$0xff]
    %v170 = vld [vmem:[%s2 + $0x1c8] sm:$0xff]
    %v171 = vld [vmem:[%s2 + $0x1d0] sm:$0xff]
    %v172 = vld [vmem:[%s2 + $0x1d8] sm:$0xff]
    %v173 = vld [vmem:[%s2 + $0x1e0] sm:$0xff]
    %v174 = vld [vmem:[%s2 + $0x1e8] sm:$0xff]
    %v175 = vld [vmem:[%s2 + $0x1f0] sm:$0xff]
    %v176 = vld [vmem:[%s2 + $0x1f8] sm:$0xff]
    %178 = vset.pattern.permute.xlu0 0
    %179 = vperm.xlu0 %178, %v113
    %v180 = vpop.permute.xlu0 %179
    %183 = vset.pattern.permute.xlu0 0
    %184 = vperm.xlu0 %183, %v114
    %v185 = vpop.permute.xlu0 %184
    %188 = vset.pattern.permute.xlu0 0
    %189 = vperm.xlu0 %188, %v115
    %v190 = vpop.permute.xlu0 %189
    %193 = vset.pattern.permute.xlu0 0
    %194 = vperm.xlu0 %193, %v116
    %v195 = vpop.permute.xlu0 %194
    %198 = vset.pattern.permute.xlu0 0
    %199 = vperm.xlu0 %198, %v117
    %v200 = vpop.permute.xlu0 %199
    %203 = vset.pattern.permute.xlu0 0
    %204 = vperm.xlu0 %203, %v118
    %v205 = vpop.permute.xlu0 %204
    %208 = vset.pattern.permute.xlu0 0
    %209 = vperm.xlu0 %208, %v119
    %v210 = vpop.permute.xlu0 %209
    %213 = vset.pattern.permute.xlu0 0
    %214 = vperm.xlu0 %213, %v120
    %v215 = vpop.permute.xlu0 %214
    %218 = vset.pattern.permute.xlu0 0
    %219 = vperm.xlu0 %218, %v121
    %v220 = vpop.permute.xlu0 %219
    %223 = vset.pattern.permute.xlu0 0
    %224 = vperm.xlu0 %223, %v122
    %v225 = vpop.permute.xlu0 %224
    %228 = vset.pattern.permute.xlu0 0
    %229 = vperm.xlu0 %228, %v123
    %v230 = vpop.permute.xlu0 %229
    %233 = vset.pattern.permute.xlu0 0
    %234 = vperm.xlu0 %233, %v124
    %v235 = vpop.permute.xlu0 %234
    %238 = vset.pattern.permute.xlu0 0
    %239 = vperm.xlu0 %238, %v125
    %v240 = vpop.permute.xlu0 %239
    %243 = vset.pattern.permute.xlu0 0
    %244 = vperm.xlu0 %243, %v126
    %v245 = vpop.permute.xlu0 %244
    %248 = vset.pattern.permute.xlu0 0
    %249 = vperm.xlu0 %248, %v127
    %v250 = vpop.permute.xlu0 %249
    %253 = vset.pattern.permute.xlu0 0
    %254 = vperm.xlu0 %253, %v128
    %v255 = vpop.permute.xlu0 %254
    %258 = vset.pattern.permute.xlu0 0
    %259 = vperm.xlu0 %258, %v129
    %v260 = vpop.permute.xlu0 %259
    %263 = vset.pattern.permute.xlu0 0
    %264 = vperm.xlu0 %263, %v130
    %v265 = vpop.permute.xlu0 %264
    %268 = vset.pattern.permute.xlu0 0
    %269 = vperm.xlu0 %268, %v131
    %v270 = vpop.permute.xlu0 %269
    %273 = vset.pattern.permute.xlu0 0
    %274 = vperm.xlu0 %273, %v132
    %v275 = vpop.permute.xlu0 %274
    %278 = vset.pattern.permute.xlu0 0
    %279 = vperm.xlu0 %278, %v133
    %v280 = vpop.permute.xlu0 %279
    %283 = vset.pattern.permute.xlu0 0
    %284 = vperm.xlu0 %283, %v134
    %v285 = vpop.permute.xlu0 %284
    %288 = vset.pattern.permute.xlu0 0
    %289 = vperm.xlu0 %288, %v135
    %v290 = vpop.permute.xlu0 %289
    %293 = vset.pattern.permute.xlu0 0
    %294 = vperm.xlu0 %293, %v136
    %v295 = vpop.permute.xlu0 %294
    %298 = vset.pattern.permute.xlu0 0
    %299 = vperm.xlu0 %298, %v137
    %v300 = vpop.permute.xlu0 %299
    %303 = vset.pattern.permute.xlu0 0
    %304 = vperm.xlu0 %303, %v138
    %v305 = vpop.permute.xlu0 %304
    %308 = vset.pattern.permute.xlu0 0
    %309 = vperm.xlu0 %308, %v139
    %v310 = vpop.permute.xlu0 %309
    %313 = vset.pattern.permute.xlu0 0
    %314 = vperm.xlu0 %313, %v140
    %v315 = vpop.permute.xlu0 %314
    %318 = vset.pattern.permute.xlu0 0
    %319 = vperm.xlu0 %318, %v141
    %v320 = vpop.permute.xlu0 %319
    %323 = vset.pattern.permute.xlu0 0
    %324 = vperm.xlu0 %323, %v142
    %v325 = vpop.permute.xlu0 %324
    %328 = vset.pattern.permute.xlu0 0
    %329 = vperm.xlu0 %328, %v143
    %v330 = vpop.permute.xlu0 %329
    %333 = vset.pattern.permute.xlu0 0
    %334 = vperm.xlu0 %333, %v144
    %v335 = vpop.permute.xlu0 %334
    %338 = vset.pattern.permute.xlu0 0
    %339 = vperm.xlu0 %338, %v145
    %v340 = vpop.permute.xlu0 %339
    %343 = vset.pattern.permute.xlu0 0
    %344 = vperm.xlu0 %343, %v146
    %v345 = vpop.permute.xlu0 %344
    %348 = vset.pattern.permute.xlu0 0
    %349 = vperm.xlu0 %348, %v147
    %v350 = vpop.permute.xlu0 %349
    %353 = vset.pattern.permute.xlu0 0
    %354 = vperm.xlu0 %353, %v148
    %v355 = vpop.permute.xlu0 %354
    %358 = vset.pattern.permute.xlu0 0
    %359 = vperm.xlu0 %358, %v149
    %v360 = vpop.permute.xlu0 %359
    %363 = vset.pattern.permute.xlu0 0
    %364 = vperm.xlu0 %363, %v150
    %v365 = vpop.permute.xlu0 %364
    %368 = vset.pattern.permute.xlu0 0
    %369 = vperm.xlu0 %368, %v151
    %v370 = vpop.permute.xlu0 %369
    %373 = vset.pattern.permute.xlu0 0
    %374 = vperm.xlu0 %373, %v152
    %v375 = vpop.permute.xlu0 %374
    %378 = vset.pattern.permute.xlu0 0
    %379 = vperm.xlu0 %378, %v153
    %v380 = vpop.permute.xlu0 %379
    %383 = vset.pattern.permute.xlu0 0
    %384 = vperm.xlu0 %383, %v154
    %v385 = vpop.permute.xlu0 %384
    %388 = vset.pattern.permute.xlu0 0
    %389 = vperm.xlu0 %388, %v155
    %v390 = vpop.permute.xlu0 %389
    %393 = vset.pattern.permute.xlu0 0
    %394 = vperm.xlu0 %393, %v156
    %v395 = vpop.permute.xlu0 %394
    %398 = vset.pattern.permute.xlu0 0
    %399 = vperm.xlu0 %398, %v157
    %v400 = vpop.permute.xlu0 %399
    %403 = vset.pattern.permute.xlu0 0
    %404 = vperm.xlu0 %403, %v158
    %v405 = vpop.permute.xlu0 %404
    %408 = vset.pattern.permute.xlu0 0
    %409 = vperm.xlu0 %408, %v159
    %v410 = vpop.permute.xlu0 %409
    %413 = vset.pattern.permute.xlu0 0
    %414 = vperm.xlu0 %413, %v160
    %v415 = vpop.permute.xlu0 %414
    %418 = vset.pattern.permute.xlu0 0
    %419 = vperm.xlu0 %418, %v161
    %v420 = vpop.permute.xlu0 %419
    %423 = vset.pattern.permute.xlu0 0
    %424 = vperm.xlu0 %423, %v162
    %v425 = vpop.permute.xlu0 %424
    %428 = vset.pattern.permute.xlu0 0
    %429 = vperm.xlu0 %428, %v163
    %v430 = vpop.permute.xlu0 %429
    %433 = vset.pattern.permute.xlu0 0
    %434 = vperm.xlu0 %433, %v164
    %v435 = vpop.permute.xlu0 %434
    %438 = vset.pattern.permute.xlu0 0
    %439 = vperm.xlu0 %438, %v165
    %v440 = vpop.permute.xlu0 %439
    %443 = vset.pattern.permute.xlu0 0
    %444 = vperm.xlu0 %443, %v166
    %v445 = vpop.permute.xlu0 %444
    %448 = vset.pattern.permute.xlu0 0
    %449 = vperm.xlu0 %448, %v167
    %v450 = vpop.permute.xlu0 %449
    %453 = vset.pattern.permute.xlu0 0
    %454 = vperm.xlu0 %453, %v168
    %v455 = vpop.permute.xlu0 %454
    %458 = vset.pattern.permute.xlu0 0
    %459 = vperm.xlu0 %458, %v169
    %v460 = vpop.permute.xlu0 %459
    %463 = vset.pattern.permute.xlu0 0
    %464 = vperm.xlu0 %463, %v170
    %v465 = vpop.permute.xlu0 %464
    %468 = vset.pattern.permute.xlu0 0
    %469 = vperm.xlu0 %468, %v171
    %v470 = vpop.permute.xlu0 %469
    %473 = vset.pattern.permute.xlu0 0
    %474 = vperm.xlu0 %473, %v172
    %v475 = vpop.permute.xlu0 %474
    %478 = vset.pattern.permute.xlu0 0
    %479 = vperm.xlu0 %478, %v173
    %v480 = vpop.permute.xlu0 %479
    %483 = vset.pattern.permute.xlu0 0
    %484 = vperm.xlu0 %483, %v174
    %v485 = vpop.permute.xlu0 %484
    %488 = vset.pattern.permute.xlu0 0
    %489 = vperm.xlu0 %488, %v175
    %v490 = vpop.permute.xlu0 %489
    %493 = vset.pattern.permute.xlu0 0
    %494 = vperm.xlu0 %493, %v176
    %v495 = vpop.permute.xlu0 %494
    %v561 = vunpack.c.l.b16 %v49
    %v562 = vunpack.c.l.b16 %v50
    %v563 = vunpack.c.l.b16 %v51
    %v564 = vunpack.c.l.b16 %v52
    %v565 = vunpack.c.l.b16 %v53
    %v566 = vunpack.c.l.b16 %v54
    %v567 = vunpack.c.l.b16 %v55
    %v568 = vunpack.c.l.b16 %v56
    %v569 = vunpack.c.l.b16 %v57
    %v570 = vunpack.c.l.b16 %v58
    %v571 = vunpack.c.l.b16 %v59
    %v572 = vunpack.c.l.b16 %v60
    %v573 = vunpack.c.l.b16 %v61
    %v574 = vunpack.c.l.b16 %v62
    %v575 = vunpack.c.l.b16 %v63
    %v576 = vunpack.c.l.b16 %v64
    %v577 = vunpack.c.l.b16 %v65
    %v578 = vunpack.c.l.b16 %v66
    %v579 = vunpack.c.l.b16 %v67
    %v580 = vunpack.c.l.b16 %v68
    %v581 = vunpack.c.l.b16 %v69
    %v582 = vunpack.c.l.b16 %v70
    %v583 = vunpack.c.l.b16 %v71
    %v584 = vunpack.c.l.b16 %v72
    %v585 = vunpack.c.l.b16 %v73
    %v586 = vunpack.c.l.b16 %v74
    %v587 = vunpack.c.l.b16 %v75
    %v588 = vunpack.c.l.b16 %v76
    %v589 = vunpack.c.l.b16 %v77
    %v590 = vunpack.c.l.b16 %v78
    %v591 = vunpack.c.l.b16 %v79
    %v592 = vunpack.c.l.b16 %v80
    %v593 = vunpack.c.l.b16 %v81
    %v594 = vunpack.c.l.b16 %v82
    %v595 = vunpack.c.l.b16 %v83
    %v596 = vunpack.c.l.b16 %v84
    %v597 = vunpack.c.l.b16 %v85
    %v598 = vunpack.c.l.b16 %v86
    %v599 = vunpack.c.l.b16 %v87
    %v600 = vunpack.c.l.b16 %v88
    %v601 = vunpack.c.l.b16 %v89
    %v602 = vunpack.c.l.b16 %v90
    %v603 = vunpack.c.l.b16 %v91
    %v604 = vunpack.c.l.b16 %v92
    %v605 = vunpack.c.l.b16 %v93
    %v606 = vunpack.c.l.b16 %v94
    %v607 = vunpack.c.l.b16 %v95
    %v608 = vunpack.c.l.b16 %v96
    %v609 = vunpack.c.l.b16 %v97
    %v610 = vunpack.c.l.b16 %v98
    %v611 = vunpack.c.l.b16 %v99
    %v612 = vunpack.c.l.b16 %v100
    %v613 = vunpack.c.l.b16 %v101
    %v614 = vunpack.c.l.b16 %v102
    %v615 = vunpack.c.l.b16 %v103
    %v616 = vunpack.c.l.b16 %v104
    %v617 = vunpack.c.l.b16 %v105
    %v618 = vunpack.c.l.b16 %v106
    %v619 = vunpack.c.l.b16 %v107
    %v620 = vunpack.c.l.b16 %v108
    %v621 = vunpack.c.l.b16 %v109
    %v622 = vunpack.c.l.b16 %v110
    %v623 = vunpack.c.l.b16 %v111
    %v624 = vunpack.c.l.b16 %v112
    %v625 = vpack.c.b16 %v562, %v561
    %v626 = vpack.c.b16 %v564, %v563
    %v627 = vpack.c.b16 %v566, %v565
    %v628 = vpack.c.b16 %v568, %v567
    %v629 = vpack.c.b16 %v570, %v569
    %v630 = vpack.c.b16 %v572, %v571
    %v631 = vpack.c.b16 %v574, %v573
    %v632 = vpack.c.b16 %v576, %v575
    %v633 = vpack.c.b16 %v578, %v577
    %v634 = vpack.c.b16 %v580, %v579
    %v635 = vpack.c.b16 %v582, %v581
    %v636 = vpack.c.b16 %v584, %v583
    %v637 = vpack.c.b16 %v586, %v585
    %v638 = vpack.c.b16 %v588, %v587
    %v639 = vpack.c.b16 %v590, %v589
    %v640 = vpack.c.b16 %v592, %v591
    %v641 = vpack.c.b16 %v594, %v593
    %v642 = vpack.c.b16 %v596, %v595
    %v643 = vpack.c.b16 %v598, %v597
    %v644 = vpack.c.b16 %v600, %v599
    %v645 = vpack.c.b16 %v602, %v601
    %v646 = vpack.c.b16 %v604, %v603
    %v647 = vpack.c.b16 %v606, %v605
    %v648 = vpack.c.b16 %v608, %v607
    %v649 = vpack.c.b16 %v610, %v609
    %v650 = vpack.c.b16 %v612, %v611
    %v651 = vpack.c.b16 %v614, %v613
    %v652 = vpack.c.b16 %v616, %v615
    %v653 = vpack.c.b16 %v618, %v617
    %v654 = vpack.c.b16 %v620, %v619
    %v655 = vpack.c.b16 %v622, %v621
    %v656 = vpack.c.b16 %v624, %v623
    %vm657 = vcmask 64512
    %v659 = vsel %vm657, %v625, 0
    %v662 = vsel %vm657, %v626, 0
    %v665 = vsel %vm657, %v627, 0
    %v668 = vsel %vm657, %v628, 0
    %v671 = vsel %vm657, %v629, 0
    %v674 = vsel %vm657, %v630, 0
    %v677 = vsel %vm657, %v631, 0
    %v680 = vsel %vm657, %v632, 0
    %v683 = vsel %vm657, %v633, 0
    %v686 = vsel %vm657, %v634, 0
    %v689 = vsel %vm657, %v635, 0
    %v692 = vsel %vm657, %v636, 0
    %v695 = vsel %vm657, %v637, 0
    %v698 = vsel %vm657, %v638, 0
    %v701 = vsel %vm657, %v639, 0
    %v704 = vsel %vm657, %v640, 0
    %v707 = vsel %vm657, %v641, 0
    %v710 = vsel %vm657, %v642, 0
    %v713 = vsel %vm657, %v643, 0
    %v716 = vsel %vm657, %v644, 0
    %v719 = vsel %vm657, %v645, 0
    %v722 = vsel %vm657, %v646, 0
    %v725 = vsel %vm657, %v647, 0
    %v728 = vsel %vm657, %v648, 0
    %v731 = vsel %vm657, %v649, 0
    %v734 = vsel %vm657, %v650, 0
    %v737 = vsel %vm657, %v651, 0
    %v740 = vsel %vm657, %v652, 0
    %v743 = vsel %vm657, %v653, 0
    %v746 = vsel %vm657, %v654, 0
    %v749 = vsel %vm657, %v655, 0
    %v752 = vsel %vm657, %v656, 0
    %vm754 = vcmask 1043456
    %v756 = vsel %vm754, %v48, 0
    %758 = vmatprep.subr.bf16.mxu0 0
    %759 = vmatpush1.bf16.msra.mxu0 0
    %760 = vmatprep.subr.bf16.mxu0 0
    %761 = vmatpush1.bf16.msra.mxu0 0
    %762 = vmatprep.subr.bf16.mxu0 0
    %763 = vmatpush1.bf16.msra.mxu0 0
    %764 = vmatprep.subr.bf16.mxu0 0
    %765 = vmatpush1.bf16.msra.mxu0 0
    %766 = vmatprep.subr.bf16.mxu0 0
    %767 = vmatpush1.bf16.msra.mxu0 0
    %768 = vmatprep.subr.bf16.mxu0 0
    %769 = vmatpush1.bf16.msra.mxu0 0
    %770 = vmatprep.subr.bf16.mxu0 0
    %771 = vmatpush1.bf16.msra.mxu0 0
    %772 = vmatprep.subr.bf16.mxu0 0
    %773 = vmatpush1.bf16.msra.mxu0 %v756
    %774 = vmatprep.subr.bf16.mxu0 0
    %775 = vmatpush2.bf16.msra.mxu0 0
    %776 = vmatprep.subr.bf16.mxu0 0
    %777 = vmatpush2.bf16.msra.mxu0 0
    %778 = vmatprep.subr.bf16.mxu0 0
    %779 = vmatpush2.bf16.msra.mxu0 0
    %780 = vmatprep.subr.bf16.mxu0 0
    %781 = vmatpush2.bf16.msra.mxu0 0
    %782 = vmatprep.subr.bf16.mxu0 0
    %783 = vmatpush2.bf16.msra.mxu0 0
    %784 = vmatprep.subr.bf16.mxu0 0
    %785 = vmatpush2.bf16.msra.mxu0 0
    %786 = vmatprep.subr.bf16.mxu0 0
    %787 = vmatpush2.bf16.msra.mxu0 0
    %788 = vmatprep.subr.bf16.mxu0 0
    %789 = vmatpush2.bf16.msra.mxu0 0
    %790 = vmatprep.mubr.bf16.mxu0 0
    %791 = vmatmul.mubr.bf16.gmra.mxu0 %v659
    %v792 = vpop.f32.mrf.mxu0
    %v793 = vadd.f32 %v180, %v792
    %v794 = vpop.f32.mrf.mxu0
    %v795 = vpop.f32.mrf.mxu0
    %v796 = vadd.f32 %v185, %v795
    %v797 = vpop.f32.mrf.mxu0
    %798 = vmatprep.mubr.bf16.mxu0 0
    %799 = vmatmul.mubr.bf16.gmra.mxu0 %v662
    %v800 = vpop.f32.mrf.mxu0
    %v801 = vadd.f32 %v190, %v800
    %v802 = vpop.f32.mrf.mxu0
    %v803 = vpop.f32.mrf.mxu0
    %v804 = vadd.f32 %v195, %v803
    %v805 = vpop.f32.mrf.mxu0
    %806 = vmatprep.mubr.bf16.mxu0 0
    %807 = vmatmul.mubr.bf16.gmra.mxu0 %v665
    %v808 = vpop.f32.mrf.mxu0
    %v809 = vadd.f32 %v200, %v808
    %v810 = vpop.f32.mrf.mxu0
    %v811 = vpop.f32.mrf.mxu0
    %v812 = vadd.f32 %v205, %v811
    %v813 = vpop.f32.mrf.mxu0
    %814 = vmatprep.mubr.bf16.mxu0 0
    %815 = vmatmul.mubr.bf16.gmra.mxu0 %v668
    %v816 = vpop.f32.mrf.mxu0
    %v817 = vadd.f32 %v210, %v816
    %v818 = vpop.f32.mrf.mxu0
    %v819 = vpop.f32.mrf.mxu0
    %v820 = vadd.f32 %v215, %v819
    %v821 = vpop.f32.mrf.mxu0
    %822 = vmatprep.mubr.bf16.mxu0 0
    %823 = vmatmul.mubr.bf16.gmra.mxu0 %v671
    %v824 = vpop.f32.mrf.mxu0
    %v825 = vadd.f32 %v220, %v824
    %v826 = vpop.f32.mrf.mxu0
    %v827 = vpop.f32.mrf.mxu0
    %v828 = vadd.f32 %v225, %v827
    %v829 = vpop.f32.mrf.mxu0
    %830 = vmatprep.mubr.bf16.mxu0 0
    %831 = vmatmul.mubr.bf16.gmra.mxu0 %v674
    %v832 = vpop.f32.mrf.mxu0
    %v833 = vadd.f32 %v230, %v832
    %v834 = vpop.f32.mrf.mxu0
    %v835 = vpop.f32.mrf.mxu0
    %v836 = vadd.f32 %v235, %v835
    %v837 = vpop.f32.mrf.mxu0
    %838 = vmatprep.mubr.bf16.mxu0 0
    %839 = vmatmul.mubr.bf16.gmra.mxu0 %v677
    %v840 = vpop.f32.mrf.mxu0
    %v841 = vadd.f32 %v240, %v840
    %v842 = vpop.f32.mrf.mxu0
    %v843 = vpop.f32.mrf.mxu0
    %v844 = vadd.f32 %v245, %v843
    %v845 = vpop.f32.mrf.mxu0
    %846 = vmatprep.mubr.bf16.mxu0 0
    %847 = vmatmul.mubr.bf16.gmra.mxu0 %v680
    %v848 = vpop.f32.mrf.mxu0
    %v849 = vadd.f32 %v250, %v848
    %v850 = vpop.f32.mrf.mxu0
    %v851 = vpop.f32.mrf.mxu0
    %v852 = vadd.f32 %v255, %v851
    %v853 = vpop.f32.mrf.mxu0
    %854 = vmatprep.mubr.bf16.mxu0 0
    %855 = vmatmul.mubr.bf16.gmra.mxu0 %v683
    %v856 = vpop.f32.mrf.mxu0
    %v857 = vadd.f32 %v260, %v856
    %v858 = vpop.f32.mrf.mxu0
    %v859 = vpop.f32.mrf.mxu0
    %v860 = vadd.f32 %v265, %v859
    %v861 = vpop.f32.mrf.mxu0
    %862 = vmatprep.mubr.bf16.mxu0 0
    %863 = vmatmul.mubr.bf16.gmra.mxu0 %v686
    %v864 = vpop.f32.mrf.mxu0
    %v865 = vadd.f32 %v270, %v864
    %v866 = vpop.f32.mrf.mxu0
    %v867 = vpop.f32.mrf.mxu0
    %v868 = vadd.f32 %v275, %v867
    %v869 = vpop.f32.mrf.mxu0
    %870 = vmatprep.mubr.bf16.mxu0 0
    %871 = vmatmul.mubr.bf16.gmra.mxu0 %v689
    %v872 = vpop.f32.mrf.mxu0
    %v873 = vadd.f32 %v280, %v872
    %v874 = vpop.f32.mrf.mxu0
    %v875 = vpop.f32.mrf.mxu0
    %v876 = vadd.f32 %v285, %v875
    %v877 = vpop.f32.mrf.mxu0
    %878 = vmatprep.mubr.bf16.mxu0 0
    %879 = vmatmul.mubr.bf16.gmra.mxu0 %v692
    %v880 = vpop.f32.mrf.mxu0
    %v881 = vadd.f32 %v290, %v880
    %v882 = vpop.f32.mrf.mxu0
    %v883 = vpop.f32.mrf.mxu0
    %v884 = vadd.f32 %v295, %v883
    %v885 = vpop.f32.mrf.mxu0
    %886 = vmatprep.mubr.bf16.mxu0 0
    %887 = vmatmul.mubr.bf16.gmra.mxu0 %v695
    %v888 = vpop.f32.mrf.mxu0
    %v889 = vadd.f32 %v300, %v888
    %v890 = vpop.f32.mrf.mxu0
    %v891 = vpop.f32.mrf.mxu0
    %v892 = vadd.f32 %v305, %v891
    %v893 = vpop.f32.mrf.mxu0
    %894 = vmatprep.mubr.bf16.mxu0 0
    %895 = vmatmul.mubr.bf16.gmra.mxu0 %v698
    %v896 = vpop.f32.mrf.mxu0
    %v897 = vadd.f32 %v310, %v896
    %v898 = vpop.f32.mrf.mxu0
    %v899 = vpop.f32.mrf.mxu0
    %v900 = vadd.f32 %v315, %v899
    %v901 = vpop.f32.mrf.mxu0
    %902 = vmatprep.mubr.bf16.mxu0 0
    %903 = vmatmul.mubr.bf16.gmra.mxu0 %v701
    %v904 = vpop.f32.mrf.mxu0
    %v905 = vadd.f32 %v320, %v904
    %v906 = vpop.f32.mrf.mxu0
    %v907 = vpop.f32.mrf.mxu0
    %v908 = vadd.f32 %v325, %v907
    %v909 = vpop.f32.mrf.mxu0
    %910 = vmatprep.mubr.bf16.mxu0 0
    %911 = vmatmul.mubr.bf16.gmra.mxu0 %v704
    %v912 = vpop.f32.mrf.mxu0
    %v913 = vadd.f32 %v330, %v912
    %v914 = vpop.f32.mrf.mxu0
    %v915 = vpop.f32.mrf.mxu0
    %v916 = vadd.f32 %v335, %v915
    %v917 = vpop.f32.mrf.mxu0
    %918 = vmatprep.mubr.bf16.mxu0 0
    %919 = vmatmul.mubr.bf16.gmra.mxu0 %v707
    %v920 = vpop.f32.mrf.mxu0
    %v921 = vadd.f32 %v340, %v920
    %v922 = vpop.f32.mrf.mxu0
    %v923 = vpop.f32.mrf.mxu0
    %v924 = vadd.f32 %v345, %v923
    %v925 = vpop.f32.mrf.mxu0
    %926 = vmatprep.mubr.bf16.mxu0 0
    %927 = vmatmul.mubr.bf16.gmra.mxu0 %v710
    %v928 = vpop.f32.mrf.mxu0
    %v929 = vadd.f32 %v350, %v928
    %v930 = vpop.f32.mrf.mxu0
    %v931 = vpop.f32.mrf.mxu0
    %v932 = vadd.f32 %v355, %v931
    %v933 = vpop.f32.mrf.mxu0
    %934 = vmatprep.mubr.bf16.mxu0 0
    %935 = vmatmul.mubr.bf16.gmra.mxu0 %v713
    %v936 = vpop.f32.mrf.mxu0
    %v937 = vadd.f32 %v360, %v936
    %v938 = vpop.f32.mrf.mxu0
    %v939 = vpop.f32.mrf.mxu0
    %v940 = vadd.f32 %v365, %v939
    %v941 = vpop.f32.mrf.mxu0
    %942 = vmatprep.mubr.bf16.mxu0 0
    %943 = vmatmul.mubr.bf16.gmra.mxu0 %v716
    %v944 = vpop.f32.mrf.mxu0
    %v945 = vadd.f32 %v370, %v944
    %v946 = vpop.f32.mrf.mxu0
    %v947 = vpop.f32.mrf.mxu0
    %v948 = vadd.f32 %v375, %v947
    %v949 = vpop.f32.mrf.mxu0
    %950 = vmatprep.mubr.bf16.mxu0 0
    %951 = vmatmul.mubr.bf16.gmra.mxu0 %v719
    %v952 = vpop.f32.mrf.mxu0
    %v953 = vadd.f32 %v380, %v952
    %v954 = vpop.f32.mrf.mxu0
    %v955 = vpop.f32.mrf.mxu0
    %v956 = vadd.f32 %v385, %v955
    %v957 = vpop.f32.mrf.mxu0
    %958 = vmatprep.mubr.bf16.mxu0 0
    %959 = vmatmul.mubr.bf16.gmra.mxu0 %v722
    %v960 = vpop.f32.mrf.mxu0
    %v961 = vadd.f32 %v390, %v960
    %v962 = vpop.f32.mrf.mxu0
    %v963 = vpop.f32.mrf.mxu0
    %v964 = vadd.f32 %v395, %v963
    %v965 = vpop.f32.mrf.mxu0
    %966 = vmatprep.mubr.bf16.mxu0 0
    %967 = vmatmul.mubr.bf16.gmra.mxu0 %v725
    %v968 = vpop.f32.mrf.mxu0
    %v969 = vadd.f32 %v400, %v968
    %v970 = vpop.f32.mrf.mxu0
    %v971 = vpop.f32.mrf.mxu0
    %v972 = vadd.f32 %v405, %v971
    %v973 = vpop.f32.mrf.mxu0
    %974 = vmatprep.mubr.bf16.mxu0 0
    %975 = vmatmul.mubr.bf16.gmra.mxu0 %v728
    %v976 = vpop.f32.mrf.mxu0
    %v977 = vadd.f32 %v410, %v976
    %v978 = vpop.f32.mrf.mxu0
    %v979 = vpop.f32.mrf.mxu0
    %v980 = vadd.f32 %v415, %v979
    %v981 = vpop.f32.mrf.mxu0
    %982 = vmatprep.mubr.bf16.mxu0 0
    %983 = vmatmul.mubr.bf16.gmra.mxu0 %v731
    %v984 = vpop.f32.mrf.mxu0
    %v985 = vadd.f32 %v420, %v984
    %v986 = vpop.f32.mrf.mxu0
    %v987 = vpop.f32.mrf.mxu0
    %v988 = vadd.f32 %v425, %v987
    %v989 = vpop.f32.mrf.mxu0
    %990 = vmatprep.mubr.bf16.mxu0 0
    %991 = vmatmul.mubr.bf16.gmra.mxu0 %v734
    %v992 = vpop.f32.mrf.mxu0
    %v993 = vadd.f32 %v430, %v992
    %v994 = vpop.f32.mrf.mxu0
    %v995 = vpop.f32.mrf.mxu0
    %v996 = vadd.f32 %v435, %v995
    %v997 = vpop.f32.mrf.mxu0
    %998 = vmatprep.mubr.bf16.mxu0 0
    %999 = vmatmul.mubr.bf16.gmra.mxu0 %v737
    %v1000 = vpop.f32.mrf.mxu0
    %v1001 = vadd.f32 %v440, %v1000
    %v1002 = vpop.f32.mrf.mxu0
    %v1003 = vpop.f32.mrf.mxu0
    %v1004 = vadd.f32 %v445, %v1003
    %v1005 = vpop.f32.mrf.mxu0
    %1006 = vmatprep.mubr.bf16.mxu0 0
    %1007 = vmatmul.mubr.bf16.gmra.mxu0 %v740
    %v1008 = vpop.f32.mrf.mxu0
    %v1009 = vadd.f32 %v450, %v1008
    %v1010 = vpop.f32.mrf.mxu0
    %v1011 = vpop.f32.mrf.mxu0
    %v1012 = vadd.f32 %v455, %v1011
    %v1013 = vpop.f32.mrf.mxu0
    %1014 = vmatprep.mubr.bf16.mxu0 0
    %1015 = vmatmul.mubr.bf16.gmra.mxu0 %v743
    %v1016 = vpop.f32.mrf.mxu0
    %v1017 = vadd.f32 %v460, %v1016
    %v1018 = vpop.f32.mrf.mxu0
    %v1019 = vpop.f32.mrf.mxu0
    %v1020 = vadd.f32 %v465, %v1019
    %v1021 = vpop.f32.mrf.mxu0
    %1022 = vmatprep.mubr.bf16.mxu0 0
    %1023 = vmatmul.mubr.bf16.gmra.mxu0 %v746
    %v1024 = vpop.f32.mrf.mxu0
    %v1025 = vadd.f32 %v470, %v1024
    %v1026 = vpop.f32.mrf.mxu0
    %v1027 = vpop.f32.mrf.mxu0
    %v1028 = vadd.f32 %v475, %v1027
    %v1029 = vpop.f32.mrf.mxu0
    %1030 = vmatprep.mubr.bf16.mxu0 0
    %1031 = vmatmul.mubr.bf16.gmra.mxu0 %v749
    %v1032 = vpop.f32.mrf.mxu0
    %v1033 = vadd.f32 %v480, %v1032
    %v1034 = vpop.f32.mrf.mxu0
    %v1035 = vpop.f32.mrf.mxu0
    %v1036 = vadd.f32 %v485, %v1035
    %v1037 = vpop.f32.mrf.mxu0
    %1038 = vmatprep.mubr.bf16.mxu0 0
    %1039 = vmatmul.mubr.bf16.gmra.mxu0 %v752
    %v1040 = vpop.f32.mrf.mxu0
    %v1041 = vadd.f32 %v490, %v1040
    %v1042 = vpop.f32.mrf.mxu0
    %v1043 = vpop.f32.mrf.mxu0
    %v1044 = vadd.f32 %v495, %v1043
    %v1045 = vpop.f32.mrf.mxu0
    %1046 = vdwg.mxu0
    %vm1047 = vcmp.gt.f32.partialorder %v793, 0.0
    %vm1048 = vcmp.gt.f32.partialorder %v796, 0.0
    %vm1049 = vcmp.gt.f32.partialorder %v801, 0.0
    %vm1050 = vcmp.gt.f32.partialorder %v804, 0.0
    %vm1051 = vcmp.gt.f32.partialorder %v809, 0.0
    %vm1052 = vcmp.gt.f32.partialorder %v812, 0.0
    %vm1053 = vcmp.gt.f32.partialorder %v817, 0.0
    %vm1054 = vcmp.gt.f32.partialorder %v820, 0.0
    %vm1055 = vcmp.gt.f32.partialorder %v825, 0.0
    %vm1056 = vcmp.gt.f32.partialorder %v828, 0.0
    %vm1057 = vcmp.gt.f32.partialorder %v833, 0.0
    %vm1058 = vcmp.gt.f32.partialorder %v836, 0.0
    %vm1059 = vcmp.gt.f32.partialorder %v841, 0.0
    %vm1060 = vcmp.gt.f32.partialorder %v844, 0.0
    %vm1061 = vcmp.gt.f32.partialorder %v849, 0.0
    %vm1062 = vcmp.gt.f32.partialorder %v852, 0.0
    %vm1063 = vcmp.gt.f32.partialorder %v857, 0.0
    %vm1064 = vcmp.gt.f32.partialorder %v860, 0.0
    %vm1065 = vcmp.gt.f32.partialorder %v865, 0.0
    %vm1066 = vcmp.gt.f32.partialorder %v868, 0.0
    %vm1067 = vcmp.gt.f32.partialorder %v873, 0.0
    %vm1068 = vcmp.gt.f32.partialorder %v876, 0.0
    %vm1069 = vcmp.gt.f32.partialorder %v881, 0.0
    %vm1070 = vcmp.gt.f32.partialorder %v884, 0.0
    %vm1071 = vcmp.gt.f32.partialorder %v889, 0.0
    %vm1072 = vcmp.gt.f32.partialorder %v892, 0.0
    %vm1073 = vcmp.gt.f32.partialorder %v897, 0.0
    %vm1074 = vcmp.gt.f32.partialorder %v900, 0.0
    %vm1075 = vcmp.gt.f32.partialorder %v905, 0.0
    %vm1076 = vcmp.gt.f32.partialorder %v908, 0.0
    %vm1077 = vcmp.gt.f32.partialorder %v913, 0.0
    %vm1078 = vcmp.gt.f32.partialorder %v916, 0.0
    %vm1079 = vcmp.gt.f32.partialorder %v921, 0.0
    %vm1080 = vcmp.gt.f32.partialorder %v924, 0.0
    %vm1081 = vcmp.gt.f32.partialorder %v929, 0.0
    %vm1082 = vcmp.gt.f32.partialorder %v932, 0.0
    %vm1083 = vcmp.gt.f32.partialorder %v937, 0.0
    %vm1084 = vcmp.gt.f32.partialorder %v940, 0.0
    %vm1085 = vcmp.gt.f32.partialorder %v945, 0.0
    %vm1086 = vcmp.gt.f32.partialorder %v948, 0.0
    %vm1087 = vcmp.gt.f32.partialorder %v953, 0.0
    %vm1088 = vcmp.gt.f32.partialorder %v956, 0.0
    %vm1089 = vcmp.gt.f32.partialorder %v961, 0.0
    %vm1090 = vcmp.gt.f32.partialorder %v964, 0.0
    %vm1091 = vcmp.gt.f32.partialorder %v969, 0.0
    %vm1092 = vcmp.gt.f32.partialorder %v972, 0.0
    %vm1093 = vcmp.gt.f32.partialorder %v977, 0.0
    %vm1094 = vcmp.gt.f32.partialorder %v980, 0.0
    %vm1095 = vcmp.gt.f32.partialorder %v985, 0.0
    %vm1096 = vcmp.gt.f32.partialorder %v988, 0.0
    %vm1097 = vcmp.gt.f32.partialorder %v993, 0.0
    %vm1098 = vcmp.gt.f32.partialorder %v996, 0.0
    %vm1099 = vcmp.gt.f32.partialorder %v1001, 0.0
    %vm1100 = vcmp.gt.f32.partialorder %v1004, 0.0
    %vm1101 = vcmp.gt.f32.partialorder %v1009, 0.0
    %vm1102 = vcmp.gt.f32.partialorder %v1012, 0.0
    %vm1103 = vcmp.gt.f32.partialorder %v1017, 0.0
    %vm1104 = vcmp.gt.f32.partialorder %v1020, 0.0
    %vm1105 = vcmp.gt.f32.partialorder %v1025, 0.0
    %vm1106 = vcmp.gt.f32.partialorder %v1028, 0.0
    %vm1107 = vcmp.gt.f32.partialorder %v1033, 0.0
    %vm1108 = vcmp.gt.f32.partialorder %v1036, 0.0
    %vm1109 = vcmp.gt.f32.partialorder %v1041, 0.0
    %vm1110 = vcmp.gt.f32.partialorder %v1044, 0.0
    %v1111 = vmul.f32 %v793, 0.1
    %v1112 = vmul.f32 %v796, 0.1
    %v1113 = vmul.f32 %v801, 0.1
    %v1114 = vmul.f32 %v804, 0.1
    %v1115 = vmul.f32 %v809, 0.1
    %v1116 = vmul.f32 %v812, 0.1
    %v1117 = vmul.f32 %v817, 0.1
    %v1118 = vmul.f32 %v820, 0.1
    %v1119 = vmul.f32 %v825, 0.1
    %v1120 = vmul.f32 %v828, 0.1
    %v1121 = vmul.f32 %v833, 0.1
    %v1122 = vmul.f32 %v836, 0.1
    %v1123 = vmul.f32 %v841, 0.1
    %v1124 = vmul.f32 %v844, 0.1
    %v1125 = vmul.f32 %v849, 0.1
    %v1126 = vmul.f32 %v852, 0.1
    %v1127 = vmul.f32 %v857, 0.1
    %v1128 = vmul.f32 %v860, 0.1
    %v1129 = vmul.f32 %v865, 0.1
    %v1130 = vmul.f32 %v868, 0.1
    %v1131 = vmul.f32 %v873, 0.1
    %v1132 = vmul.f32 %v876, 0.1
    %v1133 = vmul.f32 %v881, 0.1
    %v1134 = vmul.f32 %v884, 0.1
    %v1135 = vmul.f32 %v889, 0.1
    %v1136 = vmul.f32 %v892, 0.1
    %v1137 = vmul.f32 %v897, 0.1
    %v1138 = vmul.f32 %v900, 0.1
    %v1139 = vmul.f32 %v905, 0.1
    %v1140 = vmul.f32 %v908, 0.1
    %v1141 = vmul.f32 %v913, 0.1
    %v1142 = vmul.f32 %v916, 0.1
    %v1143 = vmul.f32 %v921, 0.1
    %v1144 = vmul.f32 %v924, 0.1
    %v1145 = vmul.f32 %v929, 0.1
    %v1146 = vmul.f32 %v932, 0.1
    %v1147 = vmul.f32 %v937, 0.1
    %v1148 = vmul.f32 %v940, 0.1
    %v1149 = vmul.f32 %v945, 0.1
    %v1150 = vmul.f32 %v948, 0.1
    %v1151 = vmul.f32 %v953, 0.1
    %v1152 = vmul.f32 %v956, 0.1
    %v1153 = vmul.f32 %v961, 0.1
    %v1154 = vmul.f32 %v964, 0.1
    %v1155 = vmul.f32 %v969, 0.1
    %v1156 = vmul.f32 %v972, 0.1
    %v1157 = vmul.f32 %v977, 0.1
    %v1158 = vmul.f32 %v980, 0.1
    %v1159 = vmul.f32 %v985, 0.1
    %v1160 = vmul.f32 %v988, 0.1
    %v1161 = vmul.f32 %v993, 0.1
    %v1162 = vmul.f32 %v996, 0.1
    %v1163 = vmul.f32 %v1001, 0.1
    %v1164 = vmul.f32 %v1004, 0.1
    %v1165 = vmul.f32 %v1009, 0.1
    %v1166 = vmul.f32 %v1012, 0.1
    %v1167 = vmul.f32 %v1017, 0.1
    %v1168 = vmul.f32 %v1020, 0.1
    %v1169 = vmul.f32 %v1025, 0.1
    %v1170 = vmul.f32 %v1028, 0.1
    %v1171 = vmul.f32 %v1033, 0.1
    %v1172 = vmul.f32 %v1036, 0.1
    %v1173 = vmul.f32 %v1041, 0.1
    %v1174 = vmul.f32 %v1044, 0.1
    %v1175 = vsel %vm1047, %v793, %v1111
    %v1176 = vsel %vm1048, %v796, %v1112
    %v1177 = vsel %vm1049, %v801, %v1113
    %v1178 = vsel %vm1050, %v804, %v1114
    %v1179 = vsel %vm1051, %v809, %v1115
    %v1180 = vsel %vm1052, %v812, %v1116
    %v1181 = vsel %vm1053, %v817, %v1117
    %v1182 = vsel %vm1054, %v820, %v1118
    %v1183 = vsel %vm1055, %v825, %v1119
    %v1184 = vsel %vm1056, %v828, %v1120
    %v1185 = vsel %vm1057, %v833, %v1121
    %v1186 = vsel %vm1058, %v836, %v1122
    %v1187 = vsel %vm1059, %v841, %v1123
    %v1188 = vsel %vm1060, %v844, %v1124
    %v1189 = vsel %vm1061, %v849, %v1125
    %v1190 = vsel %vm1062, %v852, %v1126
    %v1191 = vsel %vm1063, %v857, %v1127
    %v1192 = vsel %vm1064, %v860, %v1128
    %v1193 = vsel %vm1065, %v865, %v1129
    %v1194 = vsel %vm1066, %v868, %v1130
    %v1195 = vsel %vm1067, %v873, %v1131
    %v1196 = vsel %vm1068, %v876, %v1132
    %v1197 = vsel %vm1069, %v881, %v1133
    %v1198 = vsel %vm1070, %v884, %v1134
    %v1199 = vsel %vm1071, %v889, %v1135
    %v1200 = vsel %vm1072, %v892, %v1136
    %v1201 = vsel %vm1073, %v897, %v1137
    %v1202 = vsel %vm1074, %v900, %v1138
    %v1203 = vsel %vm1075, %v905, %v1139
    %v1204 = vsel %vm1076, %v908, %v1140
    %v1205 = vsel %vm1077, %v913, %v1141
    %v1206 = vsel %vm1078, %v916, %v1142
    %v1207 = vsel %vm1079, %v921, %v1143
    %v1208 = vsel %vm1080, %v924, %v1144
    %v1209 = vsel %vm1081, %v929, %v1145
    %v1210 = vsel %vm1082, %v932, %v1146
    %v1211 = vsel %vm1083, %v937, %v1147
    %v1212 = vsel %vm1084, %v940, %v1148
    %v1213 = vsel %vm1085, %v945, %v1149
    %v1214 = vsel %vm1086, %v948, %v1150
    %v1215 = vsel %vm1087, %v953, %v1151
    %v1216 = vsel %vm1088, %v956, %v1152
    %v1217 = vsel %vm1089, %v961, %v1153
    %v1218 = vsel %vm1090, %v964, %v1154
    %v1219 = vsel %vm1091, %v969, %v1155
    %v1220 = vsel %vm1092, %v972, %v1156
    %v1221 = vsel %vm1093, %v977, %v1157
    %v1222 = vsel %vm1094, %v980, %v1158
    %v1223 = vsel %vm1095, %v985, %v1159
    %v1224 = vsel %vm1096, %v988, %v1160
    %v1225 = vsel %vm1097, %v993, %v1161
    %v1226 = vsel %vm1098, %v996, %v1162
    %v1227 = vsel %vm1099, %v1001, %v1163
    %v1228 = vsel %vm1100, %v1004, %v1164
    %v1229 = vsel %vm1101, %v1009, %v1165
    %v1230 = vsel %vm1102, %v1012, %v1166
    %v1231 = vsel %vm1103, %v1017, %v1167
    %v1232 = vsel %vm1104, %v1020, %v1168
    %v1233 = vsel %vm1105, %v1025, %v1169
    %v1234 = vsel %vm1106, %v1028, %v1170
    %v1235 = vsel %vm1107, %v1033, %v1171
    %v1236 = vsel %vm1108, %v1036, %v1172
    %v1237 = vsel %vm1109, %v1041, %v1173
    %v1238 = vsel %vm1110, %v1044, %v1174
    %v1239 = vpack.c.bf16 %v1176, %v1175
    %v1240 = vpack.c.bf16 %v1178, %v1177
    %v1241 = vpack.c.bf16 %v1180, %v1179
    %v1242 = vpack.c.bf16 %v1182, %v1181
    %v1243 = vpack.c.bf16 %v1184, %v1183
    %v1244 = vpack.c.bf16 %v1186, %v1185
    %v1245 = vpack.c.bf16 %v1188, %v1187
    %v1246 = vpack.c.bf16 %v1190, %v1189
    %v1247 = vpack.c.bf16 %v1192, %v1191
    %v1248 = vpack.c.bf16 %v1194, %v1193
    %v1249 = vpack.c.bf16 %v1196, %v1195
    %v1250 = vpack.c.bf16 %v1198, %v1197
    %v1251 = vpack.c.bf16 %v1200, %v1199
    %v1252 = vpack.c.bf16 %v1202, %v1201
    %v1253 = vpack.c.bf16 %v1204, %v1203
    %v1254 = vpack.c.bf16 %v1206, %v1205
    %v1255 = vpack.c.bf16 %v1208, %v1207
    %v1256 = vpack.c.bf16 %v1210, %v1209
    %v1257 = vpack.c.bf16 %v1212, %v1211
    %v1258 = vpack.c.bf16 %v1214, %v1213
    %v1259 = vpack.c.bf16 %v1216, %v1215
    %v1260 = vpack.c.bf16 %v1218, %v1217
    %v1261 = vpack.c.bf16 %v1220, %v1219
    %v1262 = vpack.c.bf16 %v1222, %v1221
    %v1263 = vpack.c.bf16 %v1224, %v1223
    %v1264 = vpack.c.bf16 %v1226, %v1225
    %v1265 = vpack.c.bf16 %v1228, %v1227
    %v1266 = vpack.c.bf16 %v1230, %v1229
    %v1267 = vpack.c.bf16 %v1232, %v1231
    %v1268 = vpack.c.bf16 %v1234, %v1233
    %v1269 = vpack.c.bf16 %v1236, %v1235
    %v1270 = vpack.c.bf16 %v1238, %v1237
    %v1271 = vld [vmem:[%s3] sm:$0xff]
    %v1272 = vld [vmem:[%s3 + $0x8] sm:$0xff]
    %v1273 = vld [vmem:[%s3 + $0x10] sm:$0xff]
    %v1274 = vld [vmem:[%s3 + $0x18] sm:$0xff]
    %v1275 = vld [vmem:[%s3 + $0x20] sm:$0xff]
    %v1276 = vld [vmem:[%s3 + $0x28] sm:$0xff]
    %v1277 = vld [vmem:[%s3 + $0x30] sm:$0xff]
    %v1278 = vld [vmem:[%s3 + $0x38] sm:$0xff]
    %v1279 = vld [vmem:[%s3 + $0x40] sm:$0xff]
    %v1280 = vld [vmem:[%s3 + $0x48] sm:$0xff]
    %v1281 = vld [vmem:[%s3 + $0x50] sm:$0xff]
    %v1282 = vld [vmem:[%s3 + $0x58] sm:$0xff]
    %v1283 = vld [vmem:[%s3 + $0x60] sm:$0xff]
    %v1284 = vld [vmem:[%s3 + $0x68] sm:$0xff]
    %v1285 = vld [vmem:[%s3 + $0x70] sm:$0xff]
    %v1286 = vld [vmem:[%s3 + $0x78] sm:$0xff]
    %v1287 = vld [vmem:[%s3 + $0x80] sm:$0xff]
    %v1288 = vld [vmem:[%s3 + $0x88] sm:$0xff]
    %v1289 = vld [vmem:[%s3 + $0x90] sm:$0xff]
    %v1290 = vld [vmem:[%s3 + $0x98] sm:$0xff]
    %v1291 = vld [vmem:[%s3 + $0xa0] sm:$0xff]
    %v1292 = vld [vmem:[%s3 + $0xa8] sm:$0xff]
    %v1293 = vld [vmem:[%s3 + $0xb0] sm:$0xff]
    %v1294 = vld [vmem:[%s3 + $0xb8] sm:$0xff]
    %v1295 = vld [vmem:[%s3 + $0xc0] sm:$0xff]
    %v1296 = vld [vmem:[%s3 + $0xc8] sm:$0xff]
    %v1297 = vld [vmem:[%s3 + $0xd0] sm:$0xff]
    %v1298 = vld [vmem:[%s3 + $0xd8] sm:$0xff]
    %v1299 = vld [vmem:[%s3 + $0xe0] sm:$0xff]
    %v1300 = vld [vmem:[%s3 + $0xe8] sm:$0xff]
    %v1301 = vld [vmem:[%s3 + $0xf0] sm:$0xff]
    %v1302 = vld [vmem:[%s3 + $0xf8] sm:$0xff]
    %v1303 = vld [vmem:[%s3 + $0x100] sm:$0xff]
    %v1304 = vld [vmem:[%s3 + $0x108] sm:$0xff]
    %v1305 = vld [vmem:[%s3 + $0x110] sm:$0xff]
    %v1306 = vld [vmem:[%s3 + $0x118] sm:$0xff]
    %v1307 = vld [vmem:[%s3 + $0x120] sm:$0xff]
    %v1308 = vld [vmem:[%s3 + $0x128] sm:$0xff]
    %v1309 = vld [vmem:[%s3 + $0x130] sm:$0xff]
    %v1310 = vld [vmem:[%s3 + $0x138] sm:$0xff]
    %v1311 = vld [vmem:[%s3 + $0x140] sm:$0xff]
    %v1312 = vld [vmem:[%s3 + $0x148] sm:$0xff]
    %v1313 = vld [vmem:[%s3 + $0x150] sm:$0xff]
    %v1314 = vld [vmem:[%s3 + $0x158] sm:$0xff]
    %v1315 = vld [vmem:[%s3 + $0x160] sm:$0xff]
    %v1316 = vld [vmem:[%s3 + $0x168] sm:$0xff]
    %v1317 = vld [vmem:[%s3 + $0x170] sm:$0xff]
    %v1318 = vld [vmem:[%s3 + $0x178] sm:$0xff]
    %v1319 = vld [vmem:[%s3 + $0x180] sm:$0xff]
    %v1320 = vld [vmem:[%s3 + $0x188] sm:$0xff]
    %v1321 = vld [vmem:[%s3 + $0x190] sm:$0xff]
    %v1322 = vld [vmem:[%s3 + $0x198] sm:$0xff]
    %v1323 = vld [vmem:[%s3 + $0x1a0] sm:$0xff]
    %v1324 = vld [vmem:[%s3 + $0x1a8] sm:$0xff]
    %v1325 = vld [vmem:[%s3 + $0x1b0] sm:$0xff]
    %v1326 = vld [vmem:[%s3 + $0x1b8] sm:$0xff]
    %v1327 = vld [vmem:[%s3 + $0x1c0] sm:$0xff]
    %v1328 = vld [vmem:[%s3 + $0x1c8] sm:$0xff]
    %v1329 = vld [vmem:[%s3 + $0x1d0] sm:$0xff]
    %v1330 = vld [vmem:[%s3 + $0x1d8] sm:$0xff]
    %v1331 = vld [vmem:[%s3 + $0x1e0] sm:$0xff]
    %v1332 = vld [vmem:[%s3 + $0x1e8] sm:$0xff]
    %v1333 = vld [vmem:[%s3 + $0x1f0] sm:$0xff]
    %v1334 = vld [vmem:[%s3 + $0x1f8] sm:$0xff]
    %v1335 = vld [vmem:[%s4] sm:$0xff]
    %v1336 = vld [vmem:[%s4 + $0x8] sm:$0xff]
    %v1337 = vld [vmem:[%s4 + $0x10] sm:$0xff]
    %v1338 = vld [vmem:[%s4 + $0x18] sm:$0xff]
    %v1339 = vld [vmem:[%s4 + $0x20] sm:$0xff]
    %v1340 = vld [vmem:[%s4 + $0x28] sm:$0xff]
    %v1341 = vld [vmem:[%s4 + $0x30] sm:$0xff]
    %v1342 = vld [vmem:[%s4 + $0x38] sm:$0xff]
    %v1343 = vld [vmem:[%s4 + $0x40] sm:$0xff]
    %v1344 = vld [vmem:[%s4 + $0x48] sm:$0xff]
    %v1345 = vld [vmem:[%s4 + $0x50] sm:$0xff]
    %v1346 = vld [vmem:[%s4 + $0x58] sm:$0xff]
    %v1347 = vld [vmem:[%s4 + $0x60] sm:$0xff]
    %v1348 = vld [vmem:[%s4 + $0x68] sm:$0xff]
    %v1349 = vld [vmem:[%s4 + $0x70] sm:$0xff]
    %v1350 = vld [vmem:[%s4 + $0x78] sm:$0xff]
    %v1351 = vld [vmem:[%s4 + $0x80] sm:$0xff]
    %v1352 = vld [vmem:[%s4 + $0x88] sm:$0xff]
    %v1353 = vld [vmem:[%s4 + $0x90] sm:$0xff]
    %v1354 = vld [vmem:[%s4 + $0x98] sm:$0xff]
    %v1355 = vld [vmem:[%s4 + $0xa0] sm:$0xff]
    %v1356 = vld [vmem:[%s4 + $0xa8] sm:$0xff]
    %v1357 = vld [vmem:[%s4 + $0xb0] sm:$0xff]
    %v1358 = vld [vmem:[%s4 + $0xb8] sm:$0xff]
    %v1359 = vld [vmem:[%s4 + $0xc0] sm:$0xff]
    %v1360 = vld [vmem:[%s4 + $0xc8] sm:$0xff]
    %v1361 = vld [vmem:[%s4 + $0xd0] sm:$0xff]
    %v1362 = vld [vmem:[%s4 + $0xd8] sm:$0xff]
    %v1363 = vld [vmem:[%s4 + $0xe0] sm:$0xff]
    %v1364 = vld [vmem:[%s4 + $0xe8] sm:$0xff]
    %v1365 = vld [vmem:[%s4 + $0xf0] sm:$0xff]
    %v1366 = vld [vmem:[%s4 + $0xf8] sm:$0xff]
    %1368 = vset.pattern.permute.xlu0 0
    %1369 = vperm.xlu0 %1368, %v1335
    %v1370 = vpop.permute.xlu0 %1369
    %1373 = vset.pattern.permute.xlu0 0
    %1374 = vperm.xlu0 %1373, %v1336
    %v1375 = vpop.permute.xlu0 %1374
    %1378 = vset.pattern.permute.xlu0 0
    %1379 = vperm.xlu0 %1378, %v1337
    %v1380 = vpop.permute.xlu0 %1379
    %1383 = vset.pattern.permute.xlu0 0
    %1384 = vperm.xlu0 %1383, %v1338
    %v1385 = vpop.permute.xlu0 %1384
    %1388 = vset.pattern.permute.xlu0 0
    %1389 = vperm.xlu0 %1388, %v1339
    %v1390 = vpop.permute.xlu0 %1389
    %1393 = vset.pattern.permute.xlu0 0
    %1394 = vperm.xlu0 %1393, %v1340
    %v1395 = vpop.permute.xlu0 %1394
    %1398 = vset.pattern.permute.xlu0 0
    %1399 = vperm.xlu0 %1398, %v1341
    %v1400 = vpop.permute.xlu0 %1399
    %1403 = vset.pattern.permute.xlu0 0
    %1404 = vperm.xlu0 %1403, %v1342
    %v1405 = vpop.permute.xlu0 %1404
    %1408 = vset.pattern.permute.xlu0 0
    %1409 = vperm.xlu0 %1408, %v1343
    %v1410 = vpop.permute.xlu0 %1409
    %1413 = vset.pattern.permute.xlu0 0
    %1414 = vperm.xlu0 %1413, %v1344
    %v1415 = vpop.permute.xlu0 %1414
    %1418 = vset.pattern.permute.xlu0 0
    %1419 = vperm.xlu0 %1418, %v1345
    %v1420 = vpop.permute.xlu0 %1419
    %1423 = vset.pattern.permute.xlu0 0
    %1424 = vperm.xlu0 %1423, %v1346
    %v1425 = vpop.permute.xlu0 %1424
    %1428 = vset.pattern.permute.xlu0 0
    %1429 = vperm.xlu0 %1428, %v1347
    %v1430 = vpop.permute.xlu0 %1429
    %1433 = vset.pattern.permute.xlu0 0
    %1434 = vperm.xlu0 %1433, %v1348
    %v1435 = vpop.permute.xlu0 %1434
    %1438 = vset.pattern.permute.xlu0 0
    %1439 = vperm.xlu0 %1438, %v1349
    %v1440 = vpop.permute.xlu0 %1439
    %1443 = vset.pattern.permute.xlu0 0
    %1444 = vperm.xlu0 %1443, %v1350
    %v1445 = vpop.permute.xlu0 %1444
    %1448 = vset.pattern.permute.xlu0 0
    %1449 = vperm.xlu0 %1448, %v1351
    %v1450 = vpop.permute.xlu0 %1449
    %1453 = vset.pattern.permute.xlu0 0
    %1454 = vperm.xlu0 %1453, %v1352
    %v1455 = vpop.permute.xlu0 %1454
    %1458 = vset.pattern.permute.xlu0 0
    %1459 = vperm.xlu0 %1458, %v1353
    %v1460 = vpop.permute.xlu0 %1459
    %1463 = vset.pattern.permute.xlu0 0
    %1464 = vperm.xlu0 %1463, %v1354
    %v1465 = vpop.permute.xlu0 %1464
    %1468 = vset.pattern.permute.xlu0 0
    %1469 = vperm.xlu0 %1468, %v1355
    %v1470 = vpop.permute.xlu0 %1469
    %1473 = vset.pattern.permute.xlu0 0
    %1474 = vperm.xlu0 %1473, %v1356
    %v1475 = vpop.permute.xlu0 %1474
    %1478 = vset.pattern.permute.xlu0 0
    %1479 = vperm.xlu0 %1478, %v1357
    %v1480 = vpop.permute.xlu0 %1479
    %1483 = vset.pattern.permute.xlu0 0
    %1484 = vperm.xlu0 %1483, %v1358
    %v1485 = vpop.permute.xlu0 %1484
    %1488 = vset.pattern.permute.xlu0 0
    %1489 = vperm.xlu0 %1488, %v1359
    %v1490 = vpop.permute.xlu0 %1489
    %1493 = vset.pattern.permute.xlu0 0
    %1494 = vperm.xlu0 %1493, %v1360
    %v1495 = vpop.permute.xlu0 %1494
    %1498 = vset.pattern.permute.xlu0 0
    %1499 = vperm.xlu0 %1498, %v1361
    %v1500 = vpop.permute.xlu0 %1499
    %1503 = vset.pattern.permute.xlu0 0
    %1504 = vperm.xlu0 %1503, %v1362
    %v1505 = vpop.permute.xlu0 %1504
    %1508 = vset.pattern.permute.xlu0 0
    %1509 = vperm.xlu0 %1508, %v1363
    %v1510 = vpop.permute.xlu0 %1509
    %1513 = vset.pattern.permute.xlu0 0
    %1514 = vperm.xlu0 %1513, %v1364
    %v1515 = vpop.permute.xlu0 %1514
    %1518 = vset.pattern.permute.xlu0 0
    %1519 = vperm.xlu0 %1518, %v1365
    %v1520 = vpop.permute.xlu0 %1519
    %1523 = vset.pattern.permute.xlu0 0
    %1524 = vperm.xlu0 %1523, %v1366
    %v1525 = vpop.permute.xlu0 %1524
    %v1591 = vunpack.c.l.b16 %v1271
    %v1592 = vunpack.c.h.b16 %v1271
    %v1593 = vunpack.c.l.b16 %v1272
    %v1594 = vunpack.c.h.b16 %v1272
    %v1595 = vunpack.c.l.b16 %v1273
    %v1596 = vunpack.c.h.b16 %v1273
    %v1597 = vunpack.c.l.b16 %v1274
    %v1598 = vunpack.c.h.b16 %v1274
    %v1599 = vunpack.c.l.b16 %v1275
    %v1600 = vunpack.c.h.b16 %v1275
    %v1601 = vunpack.c.l.b16 %v1276
    %v1602 = vunpack.c.h.b16 %v1276
    %v1603 = vunpack.c.l.b16 %v1277
    %v1604 = vunpack.c.h.b16 %v1277
    %v1605 = vunpack.c.l.b16 %v1278
    %v1606 = vunpack.c.h.b16 %v1278
    %v1607 = vunpack.c.l.b16 %v1279
    %v1608 = vunpack.c.h.b16 %v1279
    %v1609 = vunpack.c.l.b16 %v1280
    %v1610 = vunpack.c.h.b16 %v1280
    %v1611 = vunpack.c.l.b16 %v1281
    %v1612 = vunpack.c.h.b16 %v1281
    %v1613 = vunpack.c.l.b16 %v1282
    %v1614 = vunpack.c.h.b16 %v1282
    %v1615 = vunpack.c.l.b16 %v1283
    %v1616 = vunpack.c.h.b16 %v1283
    %v1617 = vunpack.c.l.b16 %v1284
    %v1618 = vunpack.c.h.b16 %v1284
    %v1619 = vunpack.c.l.b16 %v1285
    %v1620 = vunpack.c.h.b16 %v1285
    %v1621 = vunpack.c.l.b16 %v1286
    %v1622 = vunpack.c.h.b16 %v1286
    %v1623 = vunpack.c.l.b16 %v1287
    %v1624 = vunpack.c.h.b16 %v1287
    %v1625 = vunpack.c.l.b16 %v1288
    %v1626 = vunpack.c.h.b16 %v1288
    %v1627 = vunpack.c.l.b16 %v1289
    %v1628 = vunpack.c.h.b16 %v1289
    %v1629 = vunpack.c.l.b16 %v1290
    %v1630 = vunpack.c.h.b16 %v1290
    %v1631 = vunpack.c.l.b16 %v1291
    %v1632 = vunpack.c.h.b16 %v1291
    %v1633 = vunpack.c.l.b16 %v1292
    %v1634 = vunpack.c.h.b16 %v1292
    %v1635 = vunpack.c.l.b16 %v1293
    %v1636 = vunpack.c.h.b16 %v1293
    %v1637 = vunpack.c.l.b16 %v1294
    %v1638 = vunpack.c.h.b16 %v1294
    %v1639 = vunpack.c.l.b16 %v1295
    %v1640 = vunpack.c.h.b16 %v1295
    %v1641 = vunpack.c.l.b16 %v1296
    %v1642 = vunpack.c.h.b16 %v1296
    %v1643 = vunpack.c.l.b16 %v1297
    %v1644 = vunpack.c.h.b16 %v1297
    %v1645 = vunpack.c.l.b16 %v1298
    %v1646 = vunpack.c.h.b16 %v1298
    %v1647 = vunpack.c.l.b16 %v1299
    %v1648 = vunpack.c.h.b16 %v1299
    %v1649 = vunpack.c.l.b16 %v1300
    %v1650 = vunpack.c.h.b16 %v1300
    %v1651 = vunpack.c.l.b16 %v1301
    %v1652 = vunpack.c.h.b16 %v1301
    %v1653 = vunpack.c.l.b16 %v1302
    %v1654 = vunpack.c.h.b16 %v1302
    %v1655 = vunpack.c.l.b16 %v1303
    %v1656 = vunpack.c.h.b16 %v1303
    %v1657 = vunpack.c.l.b16 %v1304
    %v1658 = vunpack.c.h.b16 %v1304
    %v1659 = vunpack.c.l.b16 %v1305
    %v1660 = vunpack.c.h.b16 %v1305
    %v1661 = vunpack.c.l.b16 %v1306
    %v1662 = vunpack.c.h.b16 %v1306
    %v1663 = vunpack.c.l.b16 %v1307
    %v1664 = vunpack.c.h.b16 %v1307
    %v1665 = vunpack.c.l.b16 %v1308
    %v1666 = vunpack.c.h.b16 %v1308
    %v1667 = vunpack.c.l.b16 %v1309
    %v1668 = vunpack.c.h.b16 %v1309
    %v1669 = vunpack.c.l.b16 %v1310
    %v1670 = vunpack.c.h.b16 %v1310
    %v1671 = vunpack.c.l.b16 %v1311
    %v1672 = vunpack.c.h.b16 %v1311
    %v1673 = vunpack.c.l.b16 %v1312
    %v1674 = vunpack.c.h.b16 %v1312
    %v1675 = vunpack.c.l.b16 %v1313
    %v1676 = vunpack.c.h.b16 %v1313
    %v1677 = vunpack.c.l.b16 %v1314
    %v1678 = vunpack.c.h.b16 %v1314
    %v1679 = vunpack.c.l.b16 %v1315
    %v1680 = vunpack.c.h.b16 %v1315
    %v1681 = vunpack.c.l.b16 %v1316
    %v1682 = vunpack.c.h.b16 %v1316
    %v1683 = vunpack.c.l.b16 %v1317
    %v1684 = vunpack.c.h.b16 %v1317
    %v1685 = vunpack.c.l.b16 %v1318
    %v1686 = vunpack.c.h.b16 %v1318
    %v1687 = vunpack.c.l.b16 %v1319
    %v1688 = vunpack.c.h.b16 %v1319
    %v1689 = vunpack.c.l.b16 %v1320
    %v1690 = vunpack.c.h.b16 %v1320
    %v1691 = vunpack.c.l.b16 %v1321
    %v1692 = vunpack.c.h.b16 %v1321
    %v1693 = vunpack.c.l.b16 %v1322
    %v1694 = vunpack.c.h.b16 %v1322
    %v1695 = vunpack.c.l.b16 %v1323
    %v1696 = vunpack.c.h.b16 %v1323
    %v1697 = vunpack.c.l.b16 %v1324
    %v1698 = vunpack.c.h.b16 %v1324
    %v1699 = vunpack.c.l.b16 %v1325
    %v1700 = vunpack.c.h.b16 %v1325
    %v1701 = vunpack.c.l.b16 %v1326
    %v1702 = vunpack.c.h.b16 %v1326
    %v1703 = vunpack.c.l.b16 %v1327
    %v1704 = vunpack.c.h.b16 %v1327
    %v1705 = vunpack.c.l.b16 %v1328
    %v1706 = vunpack.c.h.b16 %v1328
    %v1707 = vunpack.c.l.b16 %v1329
    %v1708 = vunpack.c.h.b16 %v1329
    %v1709 = vunpack.c.l.b16 %v1330
    %v1710 = vunpack.c.h.b16 %v1330
    %v1711 = vunpack.c.l.b16 %v1331
    %v1712 = vunpack.c.h.b16 %v1331
    %v1713 = vunpack.c.l.b16 %v1332
    %v1714 = vunpack.c.h.b16 %v1332
    %v1715 = vunpack.c.l.b16 %v1333
    %v1716 = vunpack.c.h.b16 %v1333
    %v1717 = vunpack.c.l.b16 %v1334
    %v1718 = vunpack.c.h.b16 %v1334
    %v1719 = vpack.c.b16 %v1595, %v1591
    %v1720 = vpack.c.b16 %v1596, %v1592
    %v1721 = vpack.c.b16 %v1597, %v1593
    %v1722 = vpack.c.b16 %v1598, %v1594
    %v1723 = vpack.c.b16 %v1603, %v1599
    %v1724 = vpack.c.b16 %v1604, %v1600
    %v1725 = vpack.c.b16 %v1605, %v1601
    %v1726 = vpack.c.b16 %v1606, %v1602
    %v1727 = vpack.c.b16 %v1611, %v1607
    %v1728 = vpack.c.b16 %v1612, %v1608
    %v1729 = vpack.c.b16 %v1613, %v1609
    %v1730 = vpack.c.b16 %v1614, %v1610
    %v1731 = vpack.c.b16 %v1619, %v1615
    %v1732 = vpack.c.b16 %v1620, %v1616
    %v1733 = vpack.c.b16 %v1621, %v1617
    %v1734 = vpack.c.b16 %v1622, %v1618
    %v1735 = vpack.c.b16 %v1627, %v1623
    %v1736 = vpack.c.b16 %v1628, %v1624
    %v1737 = vpack.c.b16 %v1629, %v1625
    %v1738 = vpack.c.b16 %v1630, %v1626
    %v1739 = vpack.c.b16 %v1635, %v1631
    %v1740 = vpack.c.b16 %v1636, %v1632
    %v1741 = vpack.c.b16 %v1637, %v1633
    %v1742 = vpack.c.b16 %v1638, %v1634
    %v1743 = vpack.c.b16 %v1643, %v1639
    %v1744 = vpack.c.b16 %v1644, %v1640
    %v1745 = vpack.c.b16 %v1645, %v1641
    %v1746 = vpack.c.b16 %v1646, %v1642
    %v1747 = vpack.c.b16 %v1651, %v1647
    %v1748 = vpack.c.b16 %v1652, %v1648
    %v1749 = vpack.c.b16 %v1653, %v1649
    %v1750 = vpack.c.b16 %v1654, %v1650
    %v1751 = vpack.c.b16 %v1659, %v1655
    %v1752 = vpack.c.b16 %v1660, %v1656
    %v1753 = vpack.c.b16 %v1661, %v1657
    %v1754 = vpack.c.b16 %v1662, %v1658
    %v1755 = vpack.c.b16 %v1667, %v1663
    %v1756 = vpack.c.b16 %v1668, %v1664
    %v1757 = vpack.c.b16 %v1669, %v1665
    %v1758 = vpack.c.b16 %v1670, %v1666
    %v1759 = vpack.c.b16 %v1675, %v1671
    %v1760 = vpack.c.b16 %v1676, %v1672
    %v1761 = vpack.c.b16 %v1677, %v1673
    %v1762 = vpack.c.b16 %v1678, %v1674
    %v1763 = vpack.c.b16 %v1683, %v1679
    %v1764 = vpack.c.b16 %v1684, %v1680
    %v1765 = vpack.c.b16 %v1685, %v1681
    %v1766 = vpack.c.b16 %v1686, %v1682
    %v1767 = vpack.c.b16 %v1691, %v1687
    %v1768 = vpack.c.b16 %v1692, %v1688
    %v1769 = vpack.c.b16 %v1693, %v1689
    %v1770 = vpack.c.b16 %v1694, %v1690
    %v1771 = vpack.c.b16 %v1699, %v1695
    %v1772 = vpack.c.b16 %v1700, %v1696
    %v1773 = vpack.c.b16 %v1701, %v1697
    %v1774 = vpack.c.b16 %v1702, %v1698
    %v1775 = vpack.c.b16 %v1707, %v1703
    %v1776 = vpack.c.b16 %v1708, %v1704
    %v1777 = vpack.c.b16 %v1709, %v1705
    %v1778 = vpack.c.b16 %v1710, %v1706
    %v1779 = vpack.c.b16 %v1715, %v1711
    %v1780 = vpack.c.b16 %v1716, %v1712
    %v1781 = vpack.c.b16 %v1717, %v1713
    %v1782 = vpack.c.b16 %v1718, %v1714
    %1847 = vmatprep.subr.bf16.mxu0 0
    %1848 = vmatpush1.bf16.msra.mxu0 %v1246
    %1849 = vmatprep.subr.bf16.mxu0 0
    %1850 = vmatpush1.bf16.msra.mxu0 %v1245
    %1851 = vmatprep.subr.bf16.mxu0 0
    %1852 = vmatpush1.bf16.msra.mxu0 %v1244
    %1853 = vmatprep.subr.bf16.mxu0 0
    %1854 = vmatpush1.bf16.msra.mxu0 %v1243
    %1855 = vmatprep.subr.bf16.mxu0 0
    %1856 = vmatpush1.bf16.msra.mxu0 %v1242
    %1857 = vmatprep.subr.bf16.mxu0 0
    %1858 = vmatpush1.bf16.msra.mxu0 %v1241
    %1859 = vmatprep.subr.bf16.mxu0 0
    %1860 = vmatpush1.bf16.msra.mxu0 %v1240
    %1861 = vmatprep.subr.bf16.mxu0 0
    %1862 = vmatpush1.bf16.msra.mxu0 %v1239
    %1863 = vmatprep.subr.bf16.mxu0 0
    %1864 = vmatpush2.bf16.msra.mxu0 %v1254
    %1865 = vmatprep.subr.bf16.mxu0 0
    %1866 = vmatpush2.bf16.msra.mxu0 %v1253
    %1867 = vmatprep.subr.bf16.mxu0 0
    %1868 = vmatpush2.bf16.msra.mxu0 %v1252
    %1869 = vmatprep.subr.bf16.mxu0 0
    %1870 = vmatpush2.bf16.msra.mxu0 %v1251
    %1871 = vmatprep.subr.bf16.mxu0 0
    %1872 = vmatpush2.bf16.msra.mxu0 %v1250
    %1873 = vmatprep.subr.bf16.mxu0 0
    %1874 = vmatpush2.bf16.msra.mxu0 %v1249
    %1875 = vmatprep.subr.bf16.mxu0 0
    %1876 = vmatpush2.bf16.msra.mxu0 %v1248
    %1877 = vmatprep.subr.bf16.mxu0 0
    %1878 = vmatpush2.bf16.msra.mxu0 %v1247
    %1879 = vmatprep.mubr.bf16.mxu0 %v1720
    %1880 = vmatmul.mubr.bf16.gmra.mxu0 %v1719
    %v1881 = vpop.f32.mrf.mxu0
    %v1882 = vadd.f32 %v1370, %v1881
    %v1883 = vpop.f32.mrf.mxu0
    %v1884 = vpop.f32.mrf.mxu0
    %v1885 = vadd.f32 %v1375, %v1884
    %v1886 = vpop.f32.mrf.mxu0
    %1887 = vmatprep.mubr.bf16.mxu0 %v1724
    %1888 = vmatmul.mubr.bf16.gmra.mxu0 %v1723
    %v1889 = vpop.f32.mrf.mxu0
    %v1890 = vadd.f32 %v1380, %v1889
    %v1891 = vpop.f32.mrf.mxu0
    %v1892 = vpop.f32.mrf.mxu0
    %v1893 = vadd.f32 %v1385, %v1892
    %v1894 = vpop.f32.mrf.mxu0
    %1895 = vmatprep.mubr.bf16.mxu0 %v1728
    %1896 = vmatmul.mubr.bf16.gmra.mxu0 %v1727
    %v1897 = vpop.f32.mrf.mxu0
    %v1898 = vadd.f32 %v1390, %v1897
    %v1899 = vpop.f32.mrf.mxu0
    %v1900 = vpop.f32.mrf.mxu0
    %v1901 = vadd.f32 %v1395, %v1900
    %v1902 = vpop.f32.mrf.mxu0
    %1903 = vmatprep.mubr.bf16.mxu0 %v1732
    %1904 = vmatmul.mubr.bf16.gmra.mxu0 %v1731
    %v1905 = vpop.f32.mrf.mxu0
    %v1906 = vadd.f32 %v1400, %v1905
    %v1907 = vpop.f32.mrf.mxu0
    %v1908 = vpop.f32.mrf.mxu0
    %v1909 = vadd.f32 %v1405, %v1908
    %v1910 = vpop.f32.mrf.mxu0
    %1911 = vmatprep.mubr.bf16.mxu0 %v1736
    %1912 = vmatmul.mubr.bf16.gmra.mxu0 %v1735
    %v1913 = vpop.f32.mrf.mxu0
    %v1914 = vadd.f32 %v1410, %v1913
    %v1915 = vpop.f32.mrf.mxu0
    %v1916 = vpop.f32.mrf.mxu0
    %v1917 = vadd.f32 %v1415, %v1916
    %v1918 = vpop.f32.mrf.mxu0
    %1919 = vmatprep.mubr.bf16.mxu0 %v1740
    %1920 = vmatmul.mubr.bf16.gmra.mxu0 %v1739
    %v1921 = vpop.f32.mrf.mxu0
    %v1922 = vadd.f32 %v1420, %v1921
    %v1923 = vpop.f32.mrf.mxu0
    %v1924 = vpop.f32.mrf.mxu0
    %v1925 = vadd.f32 %v1425, %v1924
    %v1926 = vpop.f32.mrf.mxu0
    %1927 = vmatprep.mubr.bf16.mxu0 %v1744
    %1928 = vmatmul.mubr.bf16.gmra.mxu0 %v1743
    %v1929 = vpop.f32.mrf.mxu0
    %v1930 = vadd.f32 %v1430, %v1929
    %v1931 = vpop.f32.mrf.mxu0
    %v1932 = vpop.f32.mrf.mxu0
    %v1933 = vadd.f32 %v1435, %v1932
    %v1934 = vpop.f32.mrf.mxu0
    %1935 = vmatprep.mubr.bf16.mxu0 %v1748
    %1936 = vmatmul.mubr.bf16.gmra.mxu0 %v1747
    %v1937 = vpop.f32.mrf.mxu0
    %v1938 = vadd.f32 %v1440, %v1937
    %v1939 = vpop.f32.mrf.mxu0
    %v1940 = vpop.f32.mrf.mxu0
    %v1941 = vadd.f32 %v1445, %v1940
    %v1942 = vpop.f32.mrf.mxu0
    %1943 = vmatprep.mubr.bf16.mxu0 %v1752
    %1944 = vmatmul.mubr.bf16.gmra.mxu0 %v1751
    %v1945 = vpop.f32.mrf.mxu0
    %v1946 = vadd.f32 %v1450, %v1945
    %v1947 = vpop.f32.mrf.mxu0
    %v1948 = vpop.f32.mrf.mxu0
    %v1949 = vadd.f32 %v1455, %v1948
    %v1950 = vpop.f32.mrf.mxu0
    %1951 = vmatprep.mubr.bf16.mxu0 %v1756
    %1952 = vmatmul.mubr.bf16.gmra.mxu0 %v1755
    %v1953 = vpop.f32.mrf.mxu0
    %v1954 = vadd.f32 %v1460, %v1953
    %v1955 = vpop.f32.mrf.mxu0
    %v1956 = vpop.f32.mrf.mxu0
    %v1957 = vadd.f32 %v1465, %v1956
    %v1958 = vpop.f32.mrf.mxu0
    %1959 = vmatprep.mubr.bf16.mxu0 %v1760
    %1960 = vmatmul.mubr.bf16.gmra.mxu0 %v1759
    %v1961 = vpop.f32.mrf.mxu0
    %v1962 = vadd.f32 %v1470, %v1961
    %v1963 = vpop.f32.mrf.mxu0
    %v1964 = vpop.f32.mrf.mxu0
    %v1965 = vadd.f32 %v1475, %v1964
    %v1966 = vpop.f32.mrf.mxu0
    %1967 = vmatprep.mubr.bf16.mxu0 %v1764
    %1968 = vmatmul.mubr.bf16.gmra.mxu0 %v1763
    %v1969 = vpop.f32.mrf.mxu0
    %v1970 = vadd.f32 %v1480, %v1969
    %v1971 = vpop.f32.mrf.mxu0
    %v1972 = vpop.f32.mrf.mxu0
    %v1973 = vadd.f32 %v1485, %v1972
    %v1974 = vpop.f32.mrf.mxu0
    %1975 = vmatprep.mubr.bf16.mxu0 %v1768
    %1976 = vmatmul.mubr.bf16.gmra.mxu0 %v1767
    %v1977 = vpop.f32.mrf.mxu0
    %v1978 = vadd.f32 %v1490, %v1977
    %v1979 = vpop.f32.mrf.mxu0
    %v1980 = vpop.f32.mrf.mxu0
    %v1981 = vadd.f32 %v1495, %v1980
    %v1982 = vpop.f32.mrf.mxu0
    %1983 = vmatprep.mubr.bf16.mxu0 %v1772
    %1984 = vmatmul.mubr.bf16.gmra.mxu0 %v1771
    %v1985 = vpop.f32.mrf.mxu0
    %v1986 = vadd.f32 %v1500, %v1985
    %v1987 = vpop.f32.mrf.mxu0
    %v1988 = vpop.f32.mrf.mxu0
    %v1989 = vadd.f32 %v1505, %v1988
    %v1990 = vpop.f32.mrf.mxu0
    %1991 = vmatprep.mubr.bf16.mxu0 %v1776
    %1992 = vmatmul.mubr.bf16.gmra.mxu0 %v1775
    %v1993 = vpop.f32.mrf.mxu0
    %v1994 = vadd.f32 %v1510, %v1993
    %v1995 = vpop.f32.mrf.mxu0
    %v1996 = vpop.f32.mrf.mxu0
    %v1997 = vadd.f32 %v1515, %v1996
    %v1998 = vpop.f32.mrf.mxu0
    %1999 = vmatprep.mubr.bf16.mxu0 %v1780
    %2000 = vmatmul.mubr.bf16.gmra.mxu0 %v1779
    %v2001 = vpop.f32.mrf.mxu0
    %v2002 = vadd.f32 %v1520, %v2001
    %v2003 = vpop.f32.mrf.mxu0
    %v2004 = vpop.f32.mrf.mxu0
    %v2005 = vadd.f32 %v1525, %v2004
    %v2006 = vpop.f32.mrf.mxu0
    %2007 = vdwg.mxu0
    %2008 = vmatprep.subr.bf16.mxu0 0
    %2009 = vmatpush1.bf16.msra.mxu0 %v1262
    %2010 = vmatprep.subr.bf16.mxu0 0
    %2011 = vmatpush1.bf16.msra.mxu0 %v1261
    %2012 = vmatprep.subr.bf16.mxu0 0
    %2013 = vmatpush1.bf16.msra.mxu0 %v1260
    %2014 = vmatprep.subr.bf16.mxu0 0
    %2015 = vmatpush1.bf16.msra.mxu0 %v1259
    %2016 = vmatprep.subr.bf16.mxu0 0
    %2017 = vmatpush1.bf16.msra.mxu0 %v1258
    %2018 = vmatprep.subr.bf16.mxu0 0
    %2019 = vmatpush1.bf16.msra.mxu0 %v1257
    %2020 = vmatprep.subr.bf16.mxu0 0
    %2021 = vmatpush1.bf16.msra.mxu0 %v1256
    %2022 = vmatprep.subr.bf16.mxu0 0
    %2023 = vmatpush1.bf16.msra.mxu0 %v1255
    %2024 = vmatprep.subr.bf16.mxu0 0
    %2025 = vmatpush2.bf16.msra.mxu0 %v1270
    %2026 = vmatprep.subr.bf16.mxu0 0
    %2027 = vmatpush2.bf16.msra.mxu0 %v1269
    %2028 = vmatprep.subr.bf16.mxu0 0
    %2029 = vmatpush2.bf16.msra.mxu0 %v1268
    %2030 = vmatprep.subr.bf16.mxu0 0
    %2031 = vmatpush2.bf16.msra.mxu0 %v1267
    %2032 = vmatprep.subr.bf16.mxu0 0
    %2033 = vmatpush2.bf16.msra.mxu0 %v1266
    %2034 = vmatprep.subr.bf16.mxu0 0
    %2035 = vmatpush2.bf16.msra.mxu0 %v1265
    %2036 = vmatprep.subr.bf16.mxu0 0
    %2037 = vmatpush2.bf16.msra.mxu0 %v1264
    %2038 = vmatprep.subr.bf16.mxu0 0
    %2039 = vmatpush2.bf16.msra.mxu0 %v1263
    %2040 = vmatprep.mubr.bf16.mxu0 %v1722
    %2041 = vmatmul.mubr.bf16.gmra.mxu0 %v1721
    %v2042 = vpop.f32.mrf.mxu0
    %v2043 = vadd.f32 %v1882, %v2042
    %v2044 = vpop.f32.mrf.mxu0
    %v2045 = vpop.f32.mrf.mxu0
    %v2046 = vadd.f32 %v1885, %v2045
    %v2047 = vpop.f32.mrf.mxu0
    %2048 = vmatprep.mubr.bf16.mxu0 %v1726
    %2049 = vmatmul.mubr.bf16.gmra.mxu0 %v1725
    %v2050 = vpop.f32.mrf.mxu0
    %v2051 = vadd.f32 %v1890, %v2050
    %v2052 = vpop.f32.mrf.mxu0
    %v2053 = vpop.f32.mrf.mxu0
    %v2054 = vadd.f32 %v1893, %v2053
    %v2055 = vpop.f32.mrf.mxu0
    %2056 = vmatprep.mubr.bf16.mxu0 %v1730
    %2057 = vmatmul.mubr.bf16.gmra.mxu0 %v1729
    %v2058 = vpop.f32.mrf.mxu0
    %v2059 = vadd.f32 %v1898, %v2058
    %v2060 = vpop.f32.mrf.mxu0
    %v2061 = vpop.f32.mrf.mxu0
    %v2062 = vadd.f32 %v1901, %v2061
    %v2063 = vpop.f32.mrf.mxu0
    %2064 = vmatprep.mubr.bf16.mxu0 %v1734
    %2065 = vmatmul.mubr.bf16.gmra.mxu0 %v1733
    %v2066 = vpop.f32.mrf.mxu0
    %v2067 = vadd.f32 %v1906, %v2066
    %v2068 = vpop.f32.mrf.mxu0
    %v2069 = vpop.f32.mrf.mxu0
    %v2070 = vadd.f32 %v1909, %v2069
    %v2071 = vpop.f32.mrf.mxu0
    %2072 = vmatprep.mubr.bf16.mxu0 %v1738
    %2073 = vmatmul.mubr.bf16.gmra.mxu0 %v1737
    %v2074 = vpop.f32.mrf.mxu0
    %v2075 = vadd.f32 %v1914, %v2074
    %v2076 = vpop.f32.mrf.mxu0
    %v2077 = vpop.f32.mrf.mxu0
    %v2078 = vadd.f32 %v1917, %v2077
    %v2079 = vpop.f32.mrf.mxu0
    %2080 = vmatprep.mubr.bf16.mxu0 %v1742
    %2081 = vmatmul.mubr.bf16.gmra.mxu0 %v1741
    %v2082 = vpop.f32.mrf.mxu0
    %v2083 = vadd.f32 %v1922, %v2082
    %v2084 = vpop.f32.mrf.mxu0
    %v2085 = vpop.f32.mrf.mxu0
    %v2086 = vadd.f32 %v1925, %v2085
    %v2087 = vpop.f32.mrf.mxu0
    %2088 = vmatprep.mubr.bf16.mxu0 %v1746
    %2089 = vmatmul.mubr.bf16.gmra.mxu0 %v1745
    %v2090 = vpop.f32.mrf.mxu0
    %v2091 = vadd.f32 %v1930, %v2090
    %v2092 = vpop.f32.mrf.mxu0
    %v2093 = vpop.f32.mrf.mxu0
    %v2094 = vadd.f32 %v1933, %v2093
    %v2095 = vpop.f32.mrf.mxu0
    %2096 = vmatprep.mubr.bf16.mxu0 %v1750
    %2097 = vmatmul.mubr.bf16.gmra.mxu0 %v1749
    %v2098 = vpop.f32.mrf.mxu0
    %v2099 = vadd.f32 %v1938, %v2098
    %v2100 = vpop.f32.mrf.mxu0
    %v2101 = vpop.f32.mrf.mxu0
    %v2102 = vadd.f32 %v1941, %v2101
    %v2103 = vpop.f32.mrf.mxu0
    %2104 = vmatprep.mubr.bf16.mxu0 %v1754
    %2105 = vmatmul.mubr.bf16.gmra.mxu0 %v1753
    %v2106 = vpop.f32.mrf.mxu0
    %v2107 = vadd.f32 %v1946, %v2106
    %v2108 = vpop.f32.mrf.mxu0
    %v2109 = vpop.f32.mrf.mxu0
    %v2110 = vadd.f32 %v1949, %v2109
    %v2111 = vpop.f32.mrf.mxu0
    %2112 = vmatprep.mubr.bf16.mxu0 %v1758
    %2113 = vmatmul.mubr.bf16.gmra.mxu0 %v1757
    %v2114 = vpop.f32.mrf.mxu0
    %v2115 = vadd.f32 %v1954, %v2114
    %v2116 = vpop.f32.mrf.mxu0
    %v2117 = vpop.f32.mrf.mxu0
    %v2118 = vadd.f32 %v1957, %v2117
    %v2119 = vpop.f32.mrf.mxu0
    %2120 = vmatprep.mubr.bf16.mxu0 %v1762
    %2121 = vmatmul.mubr.bf16.gmra.mxu0 %v1761
    %v2122 = vpop.f32.mrf.mxu0
    %v2123 = vadd.f32 %v1962, %v2122
    %v2124 = vpop.f32.mrf.mxu0
    %v2125 = vpop.f32.mrf.mxu0
    %v2126 = vadd.f32 %v1965, %v2125
    %v2127 = vpop.f32.mrf.mxu0
    %2128 = vmatprep.mubr.bf16.mxu0 %v1766
    %2129 = vmatmul.mubr.bf16.gmra.mxu0 %v1765
    %v2130 = vpop.f32.mrf.mxu0
    %v2131 = vadd.f32 %v1970, %v2130
    %v2132 = vpop.f32.mrf.mxu0
    %v2133 = vpop.f32.mrf.mxu0
    %v2134 = vadd.f32 %v1973, %v2133
    %v2135 = vpop.f32.mrf.mxu0
    %2136 = vmatprep.mubr.bf16.mxu0 %v1770
    %2137 = vmatmul.mubr.bf16.gmra.mxu0 %v1769
    %v2138 = vpop.f32.mrf.mxu0
    %v2139 = vadd.f32 %v1978, %v2138
    %v2140 = vpop.f32.mrf.mxu0
    %v2141 = vpop.f32.mrf.mxu0
    %v2142 = vadd.f32 %v1981, %v2141
    %v2143 = vpop.f32.mrf.mxu0
    %2144 = vmatprep.mubr.bf16.mxu0 %v1774
    %2145 = vmatmul.mubr.bf16.gmra.mxu0 %v1773
    %v2146 = vpop.f32.mrf.mxu0
    %v2147 = vadd.f32 %v1986, %v2146
    %v2148 = vpop.f32.mrf.mxu0
    %v2149 = vpop.f32.mrf.mxu0
    %v2150 = vadd.f32 %v1989, %v2149
    %v2151 = vpop.f32.mrf.mxu0
    %2152 = vmatprep.mubr.bf16.mxu0 %v1778
    %2153 = vmatmul.mubr.bf16.gmra.mxu0 %v1777
    %v2154 = vpop.f32.mrf.mxu0
    %v2155 = vadd.f32 %v1994, %v2154
    %v2156 = vpop.f32.mrf.mxu0
    %v2157 = vpop.f32.mrf.mxu0
    %v2158 = vadd.f32 %v1997, %v2157
    %v2159 = vpop.f32.mrf.mxu0
    %2160 = vmatprep.mubr.bf16.mxu0 %v1782
    %2161 = vmatmul.mubr.bf16.gmra.mxu0 %v1781
    %v2162 = vpop.f32.mrf.mxu0
    %v2163 = vadd.f32 %v2002, %v2162
    %v2164 = vpop.f32.mrf.mxu0
    %v2165 = vpop.f32.mrf.mxu0
    %v2166 = vadd.f32 %v2005, %v2165
    %v2167 = vpop.f32.mrf.mxu0
    %2168 = vdwg.mxu0
    %vm2169 = vcmp.gt.f32.partialorder %v2043, 0.0
    %vm2170 = vcmp.gt.f32.partialorder %v2046, 0.0
    %vm2171 = vcmp.gt.f32.partialorder %v2051, 0.0
    %vm2172 = vcmp.gt.f32.partialorder %v2054, 0.0
    %vm2173 = vcmp.gt.f32.partialorder %v2059, 0.0
    %vm2174 = vcmp.gt.f32.partialorder %v2062, 0.0
    %vm2175 = vcmp.gt.f32.partialorder %v2067, 0.0
    %vm2176 = vcmp.gt.f32.partialorder %v2070, 0.0
    %vm2177 = vcmp.gt.f32.partialorder %v2075, 0.0
    %vm2178 = vcmp.gt.f32.partialorder %v2078, 0.0
    %vm2179 = vcmp.gt.f32.partialorder %v2083, 0.0
    %vm2180 = vcmp.gt.f32.partialorder %v2086, 0.0
    %vm2181 = vcmp.gt.f32.partialorder %v2091, 0.0
    %vm2182 = vcmp.gt.f32.partialorder %v2094, 0.0
    %vm2183 = vcmp.gt.f32.partialorder %v2099, 0.0
    %vm2184 = vcmp.gt.f32.partialorder %v2102, 0.0
    %vm2185 = vcmp.gt.f32.partialorder %v2107, 0.0
    %vm2186 = vcmp.gt.f32.partialorder %v2110, 0.0
    %vm2187 = vcmp.gt.f32.partialorder %v2115, 0.0
    %vm2188 = vcmp.gt.f32.partialorder %v2118, 0.0
    %vm2189 = vcmp.gt.f32.partialorder %v2123, 0.0
    %vm2190 = vcmp.gt.f32.partialorder %v2126, 0.0
    %vm2191 = vcmp.gt.f32.partialorder %v2131, 0.0
    %vm2192 = vcmp.gt.f32.partialorder %v2134, 0.0
    %vm2193 = vcmp.gt.f32.partialorder %v2139, 0.0
    %vm2194 = vcmp.gt.f32.partialorder %v2142, 0.0
    %vm2195 = vcmp.gt.f32.partialorder %v2147, 0.0
    %vm2196 = vcmp.gt.f32.partialorder %v2150, 0.0
    %vm2197 = vcmp.gt.f32.partialorder %v2155, 0.0
    %vm2198 = vcmp.gt.f32.partialorder %v2158, 0.0
    %vm2199 = vcmp.gt.f32.partialorder %v2163, 0.0
    %vm2200 = vcmp.gt.f32.partialorder %v2166, 0.0
    %v2201 = vmul.f32 %v2043, 0.1
    %v2202 = vmul.f32 %v2046, 0.1
    %v2203 = vmul.f32 %v2051, 0.1
    %v2204 = vmul.f32 %v2054, 0.1
    %v2205 = vmul.f32 %v2059, 0.1
    %v2206 = vmul.f32 %v2062, 0.1
    %v2207 = vmul.f32 %v2067, 0.1
    %v2208 = vmul.f32 %v2070, 0.1
    %v2209 = vmul.f32 %v2075, 0.1
    %v2210 = vmul.f32 %v2078, 0.1
    %v2211 = vmul.f32 %v2083, 0.1
    %v2212 = vmul.f32 %v2086, 0.1
    %v2213 = vmul.f32 %v2091, 0.1
    %v2214 = vmul.f32 %v2094, 0.1
    %v2215 = vmul.f32 %v2099, 0.1
    %v2216 = vmul.f32 %v2102, 0.1
    %v2217 = vmul.f32 %v2107, 0.1
    %v2218 = vmul.f32 %v2110, 0.1
    %v2219 = vmul.f32 %v2115, 0.1
    %v2220 = vmul.f32 %v2118, 0.1
    %v2221 = vmul.f32 %v2123, 0.1
    %v2222 = vmul.f32 %v2126, 0.1
    %v2223 = vmul.f32 %v2131, 0.1
    %v2224 = vmul.f32 %v2134, 0.1
    %v2225 = vmul.f32 %v2139, 0.1
    %v2226 = vmul.f32 %v2142, 0.1
    %v2227 = vmul.f32 %v2147, 0.1
    %v2228 = vmul.f32 %v2150, 0.1
    %v2229 = vmul.f32 %v2155, 0.1
    %v2230 = vmul.f32 %v2158, 0.1
    %v2231 = vmul.f32 %v2163, 0.1
    %v2232 = vmul.f32 %v2166, 0.1
    %v2233 = vsel %vm2169, %v2043, %v2201
    %v2234 = vsel %vm2170, %v2046, %v2202
    %v2235 = vsel %vm2171, %v2051, %v2203
    %v2236 = vsel %vm2172, %v2054, %v2204
    %v2237 = vsel %vm2173, %v2059, %v2205
    %v2238 = vsel %vm2174, %v2062, %v2206
    %v2239 = vsel %vm2175, %v2067, %v2207
    %v2240 = vsel %vm2176, %v2070, %v2208
    %v2241 = vsel %vm2177, %v2075, %v2209
    %v2242 = vsel %vm2178, %v2078, %v2210
    %v2243 = vsel %vm2179, %v2083, %v2211
    %v2244 = vsel %vm2180, %v2086, %v2212
    %v2245 = vsel %vm2181, %v2091, %v2213
    %v2246 = vsel %vm2182, %v2094, %v2214
    %v2247 = vsel %vm2183, %v2099, %v2215
    %v2248 = vsel %vm2184, %v2102, %v2216
    %v2249 = vsel %vm2185, %v2107, %v2217
    %v2250 = vsel %vm2186, %v2110, %v2218
    %v2251 = vsel %vm2187, %v2115, %v2219
    %v2252 = vsel %vm2188, %v2118, %v2220
    %v2253 = vsel %vm2189, %v2123, %v2221
    %v2254 = vsel %vm2190, %v2126, %v2222
    %v2255 = vsel %vm2191, %v2131, %v2223
    %v2256 = vsel %vm2192, %v2134, %v2224
    %v2257 = vsel %vm2193, %v2139, %v2225
    %v2258 = vsel %vm2194, %v2142, %v2226
    %v2259 = vsel %vm2195, %v2147, %v2227
    %v2260 = vsel %vm2196, %v2150, %v2228
    %v2261 = vsel %vm2197, %v2155, %v2229
    %v2262 = vsel %vm2198, %v2158, %v2230
    %v2263 = vsel %vm2199, %v2163, %v2231
    %v2264 = vsel %vm2200, %v2166, %v2232
    %v2265 = vpack.c.bf16 %v2234, %v2233
    %v2266 = vpack.c.bf16 %v2236, %v2235
    %v2267 = vpack.c.bf16 %v2238, %v2237
    %v2268 = vpack.c.bf16 %v2240, %v2239
    %v2269 = vpack.c.bf16 %v2242, %v2241
    %v2270 = vpack.c.bf16 %v2244, %v2243
    %v2271 = vpack.c.bf16 %v2246, %v2245
    %v2272 = vpack.c.bf16 %v2248, %v2247
    %v2273 = vpack.c.bf16 %v2250, %v2249
    %v2274 = vpack.c.bf16 %v2252, %v2251
    %v2275 = vpack.c.bf16 %v2254, %v2253
    %v2276 = vpack.c.bf16 %v2256, %v2255
    %v2277 = vpack.c.bf16 %v2258, %v2257
    %v2278 = vpack.c.bf16 %v2260, %v2259
    %v2279 = vpack.c.bf16 %v2262, %v2261
    %v2280 = vpack.c.bf16 %v2264, %v2263
    %v2281 = vld [vmem:[%s5] sm:$0xff]
    %v2282 = vld [vmem:[%s5 + $0x8] sm:$0xff]
    %v2283 = vld [vmem:[%s5 + $0x10] sm:$0xff]
    %v2284 = vld [vmem:[%s5 + $0x18] sm:$0xff]
    %v2285 = vld [vmem:[%s5 + $0x20] sm:$0xff]
    %v2286 = vld [vmem:[%s5 + $0x28] sm:$0xff]
    %v2287 = vld [vmem:[%s5 + $0x30] sm:$0xff]
    %v2288 = vld [vmem:[%s5 + $0x38] sm:$0xff]
    %v2289 = vld [vmem:[%s5 + $0x40] sm:$0xff]
    %v2290 = vld [vmem:[%s5 + $0x48] sm:$0xff]
    %v2291 = vld [vmem:[%s5 + $0x50] sm:$0xff]
    %v2292 = vld [vmem:[%s5 + $0x58] sm:$0xff]
    %v2293 = vld [vmem:[%s5 + $0x60] sm:$0xff]
    %v2294 = vld [vmem:[%s5 + $0x68] sm:$0xff]
    %v2295 = vld [vmem:[%s5 + $0x70] sm:$0xff]
    %v2296 = vld [vmem:[%s5 + $0x78] sm:$0xff]
    %v2297 = vld [vmem:[%s6] sm:$0xff]
    %v2298 = vld [vmem:[%s6 + $0x8] sm:$0xff]
    %v2299 = vld [vmem:[%s6 + $0x10] sm:$0xff]
    %v2300 = vld [vmem:[%s6 + $0x18] sm:$0xff]
    %v2301 = vld [vmem:[%s6 + $0x20] sm:$0xff]
    %v2302 = vld [vmem:[%s6 + $0x28] sm:$0xff]
    %v2303 = vld [vmem:[%s6 + $0x30] sm:$0xff]
    %v2304 = vld [vmem:[%s6 + $0x38] sm:$0xff]
    %v2305 = vld [vmem:[%s6 + $0x40] sm:$0xff]
    %v2306 = vld [vmem:[%s6 + $0x48] sm:$0xff]
    %v2307 = vld [vmem:[%s6 + $0x50] sm:$0xff]
    %v2308 = vld [vmem:[%s6 + $0x58] sm:$0xff]
    %v2309 = vld [vmem:[%s6 + $0x60] sm:$0xff]
    %v2310 = vld [vmem:[%s6 + $0x68] sm:$0xff]
    %v2311 = vld [vmem:[%s6 + $0x70] sm:$0xff]
    %v2312 = vld [vmem:[%s6 + $0x78] sm:$0xff]
    %2314 = vset.pattern.permute.xlu0 0
    %2315 = vperm.xlu0 %2314, %v2297
    %v2316 = vpop.permute.xlu0 %2315
    %2319 = vset.pattern.permute.xlu0 0
    %2320 = vperm.xlu0 %2319, %v2298
    %v2321 = vpop.permute.xlu0 %2320
    %2324 = vset.pattern.permute.xlu0 0
    %2325 = vperm.xlu0 %2324, %v2299
    %v2326 = vpop.permute.xlu0 %2325
    %2329 = vset.pattern.permute.xlu0 0
    %2330 = vperm.xlu0 %2329, %v2300
    %v2331 = vpop.permute.xlu0 %2330
    %2334 = vset.pattern.permute.xlu0 0
    %2335 = vperm.xlu0 %2334, %v2301
    %v2336 = vpop.permute.xlu0 %2335
    %2339 = vset.pattern.permute.xlu0 0
    %2340 = vperm.xlu0 %2339, %v2302
    %v2341 = vpop.permute.xlu0 %2340
    %2344 = vset.pattern.permute.xlu0 0
    %2345 = vperm.xlu0 %2344, %v2303
    %v2346 = vpop.permute.xlu0 %2345
    %2349 = vset.pattern.permute.xlu0 0
    %2350 = vperm.xlu0 %2349, %v2304
    %v2351 = vpop.permute.xlu0 %2350
    %2354 = vset.pattern.permute.xlu0 0
    %2355 = vperm.xlu0 %2354, %v2305
    %v2356 = vpop.permute.xlu0 %2355
    %2359 = vset.pattern.permute.xlu0 0
    %2360 = vperm.xlu0 %2359, %v2306
    %v2361 = vpop.permute.xlu0 %2360
    %2364 = vset.pattern.permute.xlu0 0
    %2365 = vperm.xlu0 %2364, %v2307
    %v2366 = vpop.permute.xlu0 %2365
    %2369 = vset.pattern.permute.xlu0 0
    %2370 = vperm.xlu0 %2369, %v2308
    %v2371 = vpop.permute.xlu0 %2370
    %2374 = vset.pattern.permute.xlu0 0
    %2375 = vperm.xlu0 %2374, %v2309
    %v2376 = vpop.permute.xlu0 %2375
    %2379 = vset.pattern.permute.xlu0 0
    %2380 = vperm.xlu0 %2379, %v2310
    %v2381 = vpop.permute.xlu0 %2380
    %2384 = vset.pattern.permute.xlu0 0
    %2385 = vperm.xlu0 %2384, %v2311
    %v2386 = vpop.permute.xlu0 %2385
    %2389 = vset.pattern.permute.xlu0 0
    %2390 = vperm.xlu0 %2389, %v2312
    %v2391 = vpop.permute.xlu0 %2390
    %v2409 = vunpack.c.l.b16 %v2281
    %v2410 = vunpack.c.h.b16 %v2281
    %v2411 = vunpack.c.l.b16 %v2282
    %v2412 = vunpack.c.h.b16 %v2282
    %v2413 = vunpack.c.l.b16 %v2283
    %v2414 = vunpack.c.h.b16 %v2283
    %v2415 = vunpack.c.l.b16 %v2284
    %v2416 = vunpack.c.h.b16 %v2284
    %v2417 = vunpack.c.l.b16 %v2285
    %v2418 = vunpack.c.h.b16 %v2285
    %v2419 = vunpack.c.l.b16 %v2286
    %v2420 = vunpack.c.h.b16 %v2286
    %v2421 = vunpack.c.l.b16 %v2287
    %v2422 = vunpack.c.h.b16 %v2287
    %v2423 = vunpack.c.l.b16 %v2288
    %v2424 = vunpack.c.h.b16 %v2288
    %v2425 = vunpack.c.l.b16 %v2289
    %v2426 = vunpack.c.h.b16 %v2289
    %v2427 = vunpack.c.l.b16 %v2290
    %v2428 = vunpack.c.h.b16 %v2290
    %v2429 = vunpack.c.l.b16 %v2291
    %v2430 = vunpack.c.h.b16 %v2291
    %v2431 = vunpack.c.l.b16 %v2292
    %v2432 = vunpack.c.h.b16 %v2292
    %v2433 = vunpack.c.l.b16 %v2293
    %v2434 = vunpack.c.h.b16 %v2293
    %v2435 = vunpack.c.l.b16 %v2294
    %v2436 = vunpack.c.h.b16 %v2294
    %v2437 = vunpack.c.l.b16 %v2295
    %v2438 = vunpack.c.h.b16 %v2295
    %v2439 = vunpack.c.l.b16 %v2296
    %v2440 = vunpack.c.h.b16 %v2296
    %v2441 = vpack.c.b16 %v2411, %v2409
    %v2442 = vpack.c.b16 %v2412, %v2410
    %v2443 = vpack.c.b16 %v2415, %v2413
    %v2444 = vpack.c.b16 %v2416, %v2414
    %v2445 = vpack.c.b16 %v2419, %v2417
    %v2446 = vpack.c.b16 %v2420, %v2418
    %v2447 = vpack.c.b16 %v2423, %v2421
    %v2448 = vpack.c.b16 %v2424, %v2422
    %v2449 = vpack.c.b16 %v2427, %v2425
    %v2450 = vpack.c.b16 %v2428, %v2426
    %v2451 = vpack.c.b16 %v2431, %v2429
    %v2452 = vpack.c.b16 %v2432, %v2430
    %v2453 = vpack.c.b16 %v2435, %v2433
    %v2454 = vpack.c.b16 %v2436, %v2434
    %v2455 = vpack.c.b16 %v2439, %v2437
    %v2456 = vpack.c.b16 %v2440, %v2438
    %2473 = vmatprep.subr.bf16.mxu0 0
    %2474 = vmatpush1.bf16.msra.mxu0 %v2272
    %2475 = vmatprep.subr.bf16.mxu0 0
    %2476 = vmatpush1.bf16.msra.mxu0 %v2271
    %2477 = vmatprep.subr.bf16.mxu0 0
    %2478 = vmatpush1.bf16.msra.mxu0 %v2270
    %2479 = vmatprep.subr.bf16.mxu0 0
    %2480 = vmatpush1.bf16.msra.mxu0 %v2269
    %2481 = vmatprep.subr.bf16.mxu0 0
    %2482 = vmatpush1.bf16.msra.mxu0 %v2268
    %2483 = vmatprep.subr.bf16.mxu0 0
    %2484 = vmatpush1.bf16.msra.mxu0 %v2267
    %2485 = vmatprep.subr.bf16.mxu0 0
    %2486 = vmatpush1.bf16.msra.mxu0 %v2266
    %2487 = vmatprep.subr.bf16.mxu0 0
    %2488 = vmatpush1.bf16.msra.mxu0 %v2265
    %2489 = vmatprep.subr.bf16.mxu0 0
    %2490 = vmatpush2.bf16.msra.mxu0 %v2280
    %2491 = vmatprep.subr.bf16.mxu0 0
    %2492 = vmatpush2.bf16.msra.mxu0 %v2279
    %2493 = vmatprep.subr.bf16.mxu0 0
    %2494 = vmatpush2.bf16.msra.mxu0 %v2278
    %2495 = vmatprep.subr.bf16.mxu0 0
    %2496 = vmatpush2.bf16.msra.mxu0 %v2277
    %2497 = vmatprep.subr.bf16.mxu0 0
    %2498 = vmatpush2.bf16.msra.mxu0 %v2276
    %2499 = vmatprep.subr.bf16.mxu0 0
    %2500 = vmatpush2.bf16.msra.mxu0 %v2275
    %2501 = vmatprep.subr.bf16.mxu0 0
    %2502 = vmatpush2.bf16.msra.mxu0 %v2274
    %2503 = vmatprep.subr.bf16.mxu0 0
    %2504 = vmatpush2.bf16.msra.mxu0 %v2273
    %2505 = vmatprep.mubr.bf16.mxu0 %v2442
    %2506 = vmatmul.mubr.bf16.gmra.mxu0 %v2441
    %v2507 = vpop.f32.mrf.mxu0
    %v2508 = vadd.f32 %v2316, %v2507
    %v2509 = vpop.f32.mrf.mxu0
    %v2510 = vpop.f32.mrf.mxu0
    %v2511 = vadd.f32 %v2321, %v2510
    %v2512 = vpop.f32.mrf.mxu0
    %2513 = vmatprep.mubr.bf16.mxu0 %v2444
    %2514 = vmatmul.mubr.bf16.gmra.mxu0 %v2443
    %v2515 = vpop.f32.mrf.mxu0
    %v2516 = vadd.f32 %v2326, %v2515
    %v2517 = vpop.f32.mrf.mxu0
    %v2518 = vpop.f32.mrf.mxu0
    %v2519 = vadd.f32 %v2331, %v2518
    %v2520 = vpop.f32.mrf.mxu0
    %2521 = vmatprep.mubr.bf16.mxu0 %v2446
    %2522 = vmatmul.mubr.bf16.gmra.mxu0 %v2445
    %v2523 = vpop.f32.mrf.mxu0
    %v2524 = vadd.f32 %v2336, %v2523
    %v2525 = vpop.f32.mrf.mxu0
    %v2526 = vpop.f32.mrf.mxu0
    %v2527 = vadd.f32 %v2341, %v2526
    %v2528 = vpop.f32.mrf.mxu0
    %2529 = vmatprep.mubr.bf16.mxu0 %v2448
    %2530 = vmatmul.mubr.bf16.gmra.mxu0 %v2447
    %v2531 = vpop.f32.mrf.mxu0
    %v2532 = vadd.f32 %v2346, %v2531
    %v2533 = vpop.f32.mrf.mxu0
    %v2534 = vpop.f32.mrf.mxu0
    %v2535 = vadd.f32 %v2351, %v2534
    %v2536 = vpop.f32.mrf.mxu0
    %2537 = vmatprep.mubr.bf16.mxu0 %v2450
    %2538 = vmatmul.mubr.bf16.gmra.mxu0 %v2449
    %v2539 = vpop.f32.mrf.mxu0
    %v2540 = vadd.f32 %v2356, %v2539
    %v2541 = vpop.f32.mrf.mxu0
    %v2542 = vpop.f32.mrf.mxu0
    %v2543 = vadd.f32 %v2361, %v2542
    %v2544 = vpop.f32.mrf.mxu0
    %2545 = vmatprep.mubr.bf16.mxu0 %v2452
    %2546 = vmatmul.mubr.bf16.gmra.mxu0 %v2451
    %v2547 = vpop.f32.mrf.mxu0
    %v2548 = vadd.f32 %v2366, %v2547
    %v2549 = vpop.f32.mrf.mxu0
    %v2550 = vpop.f32.mrf.mxu0
    %v2551 = vadd.f32 %v2371, %v2550
    %v2552 = vpop.f32.mrf.mxu0
    %2553 = vmatprep.mubr.bf16.mxu0 %v2454
    %2554 = vmatmul.mubr.bf16.gmra.mxu0 %v2453
    %v2555 = vpop.f32.mrf.mxu0
    %v2556 = vadd.f32 %v2376, %v2555
    %v2557 = vpop.f32.mrf.mxu0
    %v2558 = vpop.f32.mrf.mxu0
    %v2559 = vadd.f32 %v2381, %v2558
    %v2560 = vpop.f32.mrf.mxu0
    %2561 = vmatprep.mubr.bf16.mxu0 %v2456
    %2562 = vmatmul.mubr.bf16.gmra.mxu0 %v2455
    %v2563 = vpop.f32.mrf.mxu0
    %v2564 = vadd.f32 %v2386, %v2563
    %v2565 = vpop.f32.mrf.mxu0
    %v2566 = vpop.f32.mrf.mxu0
    %v2567 = vadd.f32 %v2391, %v2566
    %v2568 = vpop.f32.mrf.mxu0
    %2569 = vdwg.mxu0
    %vm2570 = vcmp.gt.f32.partialorder %v2508, 0.0
    %vm2571 = vcmp.gt.f32.partialorder %v2511, 0.0
    %vm2572 = vcmp.gt.f32.partialorder %v2516, 0.0
    %vm2573 = vcmp.gt.f32.partialorder %v2519, 0.0
    %vm2574 = vcmp.gt.f32.partialorder %v2524, 0.0
    %vm2575 = vcmp.gt.f32.partialorder %v2527, 0.0
    %vm2576 = vcmp.gt.f32.partialorder %v2532, 0.0
    %vm2577 = vcmp.gt.f32.partialorder %v2535, 0.0
    %vm2578 = vcmp.gt.f32.partialorder %v2540, 0.0
    %vm2579 = vcmp.gt.f32.partialorder %v2543, 0.0
    %vm2580 = vcmp.gt.f32.partialorder %v2548, 0.0
    %vm2581 = vcmp.gt.f32.partialorder %v2551, 0.0
    %vm2582 = vcmp.gt.f32.partialorder %v2556, 0.0
    %vm2583 = vcmp.gt.f32.partialorder %v2559, 0.0
    %vm2584 = vcmp.gt.f32.partialorder %v2564, 0.0
    %vm2585 = vcmp.gt.f32.partialorder %v2567, 0.0
    %v2586 = vmul.f32 %v2508, 0.1
    %v2587 = vmul.f32 %v2511, 0.1
    %v2588 = vmul.f32 %v2516, 0.1
    %v2589 = vmul.f32 %v2519, 0.1
    %v2590 = vmul.f32 %v2524, 0.1
    %v2591 = vmul.f32 %v2527, 0.1
    %v2592 = vmul.f32 %v2532, 0.1
    %v2593 = vmul.f32 %v2535, 0.1
    %v2594 = vmul.f32 %v2540, 0.1
    %v2595 = vmul.f32 %v2543, 0.1
    %v2596 = vmul.f32 %v2548, 0.1
    %v2597 = vmul.f32 %v2551, 0.1
    %v2598 = vmul.f32 %v2556, 0.1
    %v2599 = vmul.f32 %v2559, 0.1
    %v2600 = vmul.f32 %v2564, 0.1
    %v2601 = vmul.f32 %v2567, 0.1
    %v2602 = vsel %vm2570, %v2508, %v2586
    %v2603 = vsel %vm2571, %v2511, %v2587
    %v2604 = vsel %vm2572, %v2516, %v2588
    %v2605 = vsel %vm2573, %v2519, %v2589
    %v2606 = vsel %vm2574, %v2524, %v2590
    %v2607 = vsel %vm2575, %v2527, %v2591
    %v2608 = vsel %vm2576, %v2532, %v2592
    %v2609 = vsel %vm2577, %v2535, %v2593
    %v2610 = vsel %vm2578, %v2540, %v2594
    %v2611 = vsel %vm2579, %v2543, %v2595
    %v2612 = vsel %vm2580, %v2548, %v2596
    %v2613 = vsel %vm2581, %v2551, %v2597
    %v2614 = vsel %vm2582, %v2556, %v2598
    %v2615 = vsel %vm2583, %v2559, %v2599
    %v2616 = vsel %vm2584, %v2564, %v2600
    %v2617 = vsel %vm2585, %v2567, %v2601
    %v2618 = vpack.c.bf16 %v2603, %v2602
    %v2619 = vpack.c.bf16 %v2605, %v2604
    %v2620 = vpack.c.bf16 %v2607, %v2606
    %v2621 = vpack.c.bf16 %v2609, %v2608
    %v2622 = vpack.c.bf16 %v2611, %v2610
    %v2623 = vpack.c.bf16 %v2613, %v2612
    %v2624 = vpack.c.bf16 %v2615, %v2614
    %v2625 = vpack.c.bf16 %v2617, %v2616
    %v2626 = vld [vmem:[%s7] sm:$0xf]
    %v2627 = vld [vmem:[%s7 + $0x4] sm:$0xf]
    %v2628 = vld [vmem:[%s7 + $0x8] sm:$0xf]
    %v2629 = vld [vmem:[%s7 + $0xc] sm:$0xf]
    %v2630 = vld [vmem:[%s7 + $0x10] sm:$0xf]
    %v2631 = vld [vmem:[%s7 + $0x14] sm:$0xf]
    %v2632 = vld [vmem:[%s7 + $0x18] sm:$0xf]
    %v2633 = vld [vmem:[%s7 + $0x1c] sm:$0xf]
    %v2634 = vld [vmem:[%s8] sm:$0xff]
    %v2635 = vld [vmem:[%s8 + $0x8] sm:$0xff]
    %v2636 = vld [vmem:[%s8 + $0x10] sm:$0xff]
    %v2637 = vld [vmem:[%s8 + $0x18] sm:$0xff]
    %v2638 = vld [vmem:[%s8 + $0x20] sm:$0xff]
    %v2639 = vld [vmem:[%s8 + $0x28] sm:$0xff]
    %v2640 = vld [vmem:[%s8 + $0x30] sm:$0xff]
    %v2641 = vld [vmem:[%s8 + $0x38] sm:$0xff]
    %2643 = vset.pattern.permute.xlu0 0
    %2644 = vperm.xlu0 %2643, %v2634
    %v2645 = vpop.permute.xlu0 %2644
    %2648 = vset.pattern.permute.xlu0 0
    %2649 = vperm.xlu0 %2648, %v2635
    %v2650 = vpop.permute.xlu0 %2649
    %2653 = vset.pattern.permute.xlu0 0
    %2654 = vperm.xlu0 %2653, %v2636
    %v2655 = vpop.permute.xlu0 %2654
    %2658 = vset.pattern.permute.xlu0 0
    %2659 = vperm.xlu0 %2658, %v2637
    %v2660 = vpop.permute.xlu0 %2659
    %2663 = vset.pattern.permute.xlu0 0
    %2664 = vperm.xlu0 %2663, %v2638
    %v2665 = vpop.permute.xlu0 %2664
    %2668 = vset.pattern.permute.xlu0 0
    %2669 = vperm.xlu0 %2668, %v2639
    %v2670 = vpop.permute.xlu0 %2669
    %2673 = vset.pattern.permute.xlu0 0
    %2674 = vperm.xlu0 %2673, %v2640
    %v2675 = vpop.permute.xlu0 %2674
    %2678 = vset.pattern.permute.xlu0 0
    %2679 = vperm.xlu0 %2678, %v2641
    %v2680 = vpop.permute.xlu0 %2679
    %v2690 = vunpack.c.l.b16 %v2626
    %v2691 = vunpack.c.l.b16 %v2627
    %v2692 = vunpack.c.l.b16 %v2628
    %v2693 = vunpack.c.l.b16 %v2629
    %v2694 = vunpack.c.l.b16 %v2630
    %v2695 = vunpack.c.l.b16 %v2631
    %v2696 = vunpack.c.l.b16 %v2632
    %v2697 = vunpack.c.l.b16 %v2633
    %v2698 = vpack.c.b16 %v2691, %v2690
    %v2699 = vpack.c.b16 %v2693, %v2692
    %v2700 = vpack.c.b16 %v2695, %v2694
    %v2701 = vpack.c.b16 %v2697, %v2696
    %2706 = vmatprep.subr.bf16.mxu0 0
    %2707 = vmatpush1.bf16.msra.mxu0 %v2625
    %2708 = vmatprep.subr.bf16.mxu0 0
    %2709 = vmatpush1.bf16.msra.mxu0 %v2624
    %2710 = vmatprep.subr.bf16.mxu0 0
    %2711 = vmatpush1.bf16.msra.mxu0 %v2623
    %2712 = vmatprep.subr.bf16.mxu0 0
    %2713 = vmatpush1.bf16.msra.mxu0 %v2622
    %2714 = vmatprep.subr.bf16.mxu0 0
    %2715 = vmatpush1.bf16.msra.mxu0 %v2621
    %2716 = vmatprep.subr.bf16.mxu0 0
    %2717 = vmatpush1.bf16.msra.mxu0 %v2620
    %2718 = vmatprep.subr.bf16.mxu0 0
    %2719 = vmatpush1.bf16.msra.mxu0 %v2619
    %2720 = vmatprep.subr.bf16.mxu0 0
    %2721 = vmatpush1.bf16.msra.mxu0 %v2618
    %2722 = vmatprep.subr.bf16.mxu0 0
    %2723 = vmatpush2.bf16.msra.mxu0 0
    %2724 = vmatprep.subr.bf16.mxu0 0
    %2725 = vmatpush2.bf16.msra.mxu0 0
    %2726 = vmatprep.subr.bf16.mxu0 0
    %2727 = vmatpush2.bf16.msra.mxu0 0
    %2728 = vmatprep.subr.bf16.mxu0 0
    %2729 = vmatpush2.bf16.msra.mxu0 0
    %2730 = vmatprep.subr.bf16.mxu0 0
    %2731 = vmatpush2.bf16.msra.mxu0 0
    %2732 = vmatprep.subr.bf16.mxu0 0
    %2733 = vmatpush2.bf16.msra.mxu0 0
    %2734 = vmatprep.subr.bf16.mxu0 0
    %2735 = vmatpush2.bf16.msra.mxu0 0
    %2736 = vmatprep.subr.bf16.mxu0 0
    %2737 = vmatpush2.bf16.msra.mxu0 0
    %2738 = vmatprep.mubr.bf16.mxu0 0
    %2739 = vmatmul.mubr.bf16.gmra.mxu0 %v2698
    %v2740 = vpop.f32.mrf.mxu0
    %v2741 = vadd.f32 %v2645, %v2740
    %v2742 = vpop.f32.mrf.mxu0
    %v2743 = vpop.f32.mrf.mxu0
    %v2744 = vadd.f32 %v2650, %v2743
    %v2745 = vpop.f32.mrf.mxu0
    %2746 = vmatprep.mubr.bf16.mxu0 0
    %2747 = vmatmul.mubr.bf16.gmra.mxu0 %v2699
    %v2748 = vpop.f32.mrf.mxu0
    %v2749 = vadd.f32 %v2655, %v2748
    %v2750 = vpop.f32.mrf.mxu0
    %v2751 = vpop.f32.mrf.mxu0
    %v2752 = vadd.f32 %v2660, %v2751
    %v2753 = vpop.f32.mrf.mxu0
    %2754 = vmatprep.mubr.bf16.mxu0 0
    %2755 = vmatmul.mubr.bf16.gmra.mxu0 %v2700
    %v2756 = vpop.f32.mrf.mxu0
    %v2757 = vadd.f32 %v2665, %v2756
    %v2758 = vpop.f32.mrf.mxu0
    %v2759 = vpop.f32.mrf.mxu0
    %v2760 = vadd.f32 %v2670, %v2759
    %v2761 = vpop.f32.mrf.mxu0
    %2762 = vmatprep.mubr.bf16.mxu0 0
    %2763 = vmatmul.mubr.bf16.gmra.mxu0 %v2701
    %v2764 = vpop.f32.mrf.mxu0
    %v2765 = vadd.f32 %v2675, %v2764
    %v2766 = vpop.f32.mrf.mxu0
    %v2767 = vpop.f32.mrf.mxu0
    %v2768 = vadd.f32 %v2680, %v2767
    %v2769 = vpop.f32.mrf.mxu0
    %2770 = vdwg.mxu0
    %vm2771 = vcmp.gt.f32.partialorder %v2741, 0.0
    %vm2772 = vcmp.gt.f32.partialorder %v2744, 0.0
    %vm2773 = vcmp.gt.f32.partialorder %v2749, 0.0
    %vm2774 = vcmp.gt.f32.partialorder %v2752, 0.0
    %vm2775 = vcmp.gt.f32.partialorder %v2757, 0.0
    %vm2776 = vcmp.gt.f32.partialorder %v2760, 0.0
    %vm2777 = vcmp.gt.f32.partialorder %v2765, 0.0
    %vm2778 = vcmp.gt.f32.partialorder %v2768, 0.0
    %v2779 = vmul.f32 %v2741, 0.1
    %v2780 = vmul.f32 %v2744, 0.1
    %v2781 = vmul.f32 %v2749, 0.1
    %v2782 = vmul.f32 %v2752, 0.1
    %v2783 = vmul.f32 %v2757, 0.1
    %v2784 = vmul.f32 %v2760, 0.1
    %v2785 = vmul.f32 %v2765, 0.1
    %v2786 = vmul.f32 %v2768, 0.1
    %v2787 = vsel %vm2771, %v2741, %v2779
    %v2788 = vsel %vm2772, %v2744, %v2780
    %v2789 = vsel %vm2773, %v2749, %v2781
    %v2790 = vsel %vm2774, %v2752, %v2782
    %v2791 = vsel %vm2775, %v2757, %v2783
    %v2792 = vsel %vm2776, %v2760, %v2784
    %v2793 = vsel %vm2777, %v2765, %v2785
    %v2794 = vsel %vm2778, %v2768, %v2786
    %v2795 = vpack.c.bf16 %v2788, %v2787
    %v2796 = vpack.c.bf16 %v2790, %v2789
    %v2797 = vpack.c.bf16 %v2792, %v2791
    %v2798 = vpack.c.bf16 %v2794, %v2793
    %v2799 = vld [vmem:[%s9] sm:$0xf]
    %v2800 = vld [vmem:[%s9 + $0x4] sm:$0xf]
    %v2801 = vld [vmem:[%s9 + $0x8] sm:$0xf]
    %v2802 = vld [vmem:[%s9 + $0xc] sm:$0xf]
    %v2803 = vld [vmem:[%s10] sm:$0xff]
    %v2804 = vld [vmem:[%s10 + $0x8] sm:$0xff]
    %v2805 = vld [vmem:[%s10 + $0x10] sm:$0xff]
    %v2806 = vld [vmem:[%s10 + $0x18] sm:$0xff]
    %2808 = vset.pattern.permute.xlu0 0
    %2809 = vperm.xlu0 %2808, %v2803
    %v2810 = vpop.permute.xlu0 %2809
    %2813 = vset.pattern.permute.xlu0 0
    %2814 = vperm.xlu0 %2813, %v2804
    %v2815 = vpop.permute.xlu0 %2814
    %2818 = vset.pattern.permute.xlu0 0
    %2819 = vperm.xlu0 %2818, %v2805
    %v2820 = vpop.permute.xlu0 %2819
    %2823 = vset.pattern.permute.xlu0 0
    %2824 = vperm.xlu0 %2823, %v2806
    %v2825 = vpop.permute.xlu0 %2824
    %v2831 = vunpack.c.l.b16 %v2799
    %v2832 = vunpack.c.l.b16 %v2800
    %v2833 = vunpack.c.l.b16 %v2801
    %v2834 = vunpack.c.l.b16 %v2802
    %v2835 = vpack.c.b16 %v2832, %v2831
    %v2836 = vpack.c.b16 %v2834, %v2833
    %vm2837 = vcmask 523264
    %v2839 = vsel %vm2837, %v2835, 0
    %v2842 = vsel %vm2837, %v2836, 0
    %2844 = vmatprep.subr.bf16.mxu0 0
    %2845 = vmatpush1.bf16.msra.mxu0 0
    %2846 = vmatprep.subr.bf16.mxu0 0
    %2847 = vmatpush1.bf16.msra.mxu0 0
    %2848 = vmatprep.subr.bf16.mxu0 0
    %2849 = vmatpush1.bf16.msra.mxu0 0
    %2850 = vmatprep.subr.bf16.mxu0 0
    %2851 = vmatpush1.bf16.msra.mxu0 0
    %2852 = vmatprep.subr.bf16.mxu0 0
    %2853 = vmatpush1.bf16.msra.mxu0 %v2798
    %2854 = vmatprep.subr.bf16.mxu0 0
    %2855 = vmatpush1.bf16.msra.mxu0 %v2797
    %2856 = vmatprep.subr.bf16.mxu0 0
    %2857 = vmatpush1.bf16.msra.mxu0 %v2796
    %2858 = vmatprep.subr.bf16.mxu0 0
    %2859 = vmatpush1.bf16.msra.mxu0 %v2795
    %2860 = vmatprep.subr.bf16.mxu0 0
    %2861 = vmatpush2.bf16.msra.mxu0 0
    %2862 = vmatprep.subr.bf16.mxu0 0
    %2863 = vmatpush2.bf16.msra.mxu0 0
    %2864 = vmatprep.subr.bf16.mxu0 0
    %2865 = vmatpush2.bf16.msra.mxu0 0
    %2866 = vmatprep.subr.bf16.mxu0 0
    %2867 = vmatpush2.bf16.msra.mxu0 0
    %2868 = vmatprep.subr.bf16.mxu0 0
    %2869 = vmatpush2.bf16.msra.mxu0 0
    %2870 = vmatprep.subr.bf16.mxu0 0
    %2871 = vmatpush2.bf16.msra.mxu0 0
    %2872 = vmatprep.subr.bf16.mxu0 0
    %2873 = vmatpush2.bf16.msra.mxu0 0
    %2874 = vmatprep.subr.bf16.mxu0 0
    %2875 = vmatpush2.bf16.msra.mxu0 0
    %2876 = vmatprep.mubr.bf16.mxu0 0
    %2877 = vmatmul.mubr.bf16.gmra.mxu0 %v2839
    %v2878 = vpop.f32.mrf.mxu0
    %v2879 = vadd.f32 %v2810, %v2878
    %v2880 = vpop.f32.mrf.mxu0
    %v2881 = vpop.f32.mrf.mxu0
    %v2882 = vadd.f32 %v2815, %v2881
    %v2883 = vpop.f32.mrf.mxu0
    %2884 = vmatprep.mubr.bf16.mxu0 0
    %2885 = vmatmul.mubr.bf16.gmra.mxu0 %v2842
    %v2886 = vpop.f32.mrf.mxu0
    %v2887 = vadd.f32 %v2820, %v2886
    %v2888 = vpop.f32.mrf.mxu0
    %v2889 = vpop.f32.mrf.mxu0
    %v2890 = vadd.f32 %v2825, %v2889
    %v2891 = vpop.f32.mrf.mxu0
    %2892 = vdwg.mxu0
    %vm2893 = vcmp.gt.f32.partialorder %v2879, 0.0
    %vm2894 = vcmp.gt.f32.partialorder %v2882, 0.0
    %vm2895 = vcmp.gt.f32.partialorder %v2887, 0.0
    %vm2896 = vcmp.gt.f32.partialorder %v2890, 0.0
    %v2897 = vmul.f32 %v2879, 0.1
    %v2898 = vmul.f32 %v2882, 0.1
    %v2899 = vmul.f32 %v2887, 0.1
    %v2900 = vmul.f32 %v2890, 0.1
    %v2901 = vsel %vm2893, %v2879, %v2897
    %v2902 = vsel %vm2894, %v2882, %v2898
    %v2903 = vsel %vm2895, %v2887, %v2899
    %v2904 = vsel %vm2896, %v2890, %v2900
    %v2905 = vpack.c.bf16 %v2902, %v2901
    %v2906 = vpack.c.bf16 %v2904, %v2903
    %v2907 = vld [vmem:[%s11] sm:$0x1]
    %v2908 = vld [vmem:[#allocation2] sm:$0x1]
    %2910 = vset.pattern.permute.xlu0 0
    %2911 = vperm.xlu0 %2910, %v2908
    %v2912 = vpop.permute.xlu0 %2911
    %v2914 = vlaneseq
    %v2915 = vshrl.u32 %v2914, 7
    %v2916 = vsub.s32 0, %v2915
    %v2917 = vrot.slane %v2912, %v2916
    %vm2918 = vcmask 261120
    %v2920 = vsel %vm2918, %v2907, 0
    %2922 = vmatprep.subr.bf16.mxu0 0
    %2923 = vmatpush1.bf16.msra.mxu0 0
    %2924 = vmatprep.subr.bf16.mxu0 0
    %2925 = vmatpush1.bf16.msra.mxu0 0
    %2926 = vmatprep.subr.bf16.mxu0 0
    %2927 = vmatpush1.bf16.msra.mxu0 0
    %2928 = vmatprep.subr.bf16.mxu0 0
    %2929 = vmatpush1.bf16.msra.mxu0 0
    %2930 = vmatprep.subr.bf16.mxu0 0
    %2931 = vmatpush1.bf16.msra.mxu0 0
    %2932 = vmatprep.subr.bf16.mxu0 0
    %2933 = vmatpush1.bf16.msra.mxu0 0
    %2934 = vmatprep.subr.bf16.mxu0 0
    %2935 = vmatpush1.bf16.msra.mxu0 %v2906
    %2936 = vmatprep.subr.bf16.mxu0 0
    %2937 = vmatpush1.bf16.msra.mxu0 %v2905
    %2938 = vmatprep.subr.bf16.mxu0 0
    %2939 = vmatpush2.bf16.msra.mxu0 0
    %2940 = vmatprep.subr.bf16.mxu0 0
    %2941 = vmatpush2.bf16.msra.mxu0 0
    %2942 = vmatprep.subr.bf16.mxu0 0
    %2943 = vmatpush2.bf16.msra.mxu0 0
    %2944 = vmatprep.subr.bf16.mxu0 0
    %2945 = vmatpush2.bf16.msra.mxu0 0
    %2946 = vmatprep.subr.bf16.mxu0 0
    %2947 = vmatpush2.bf16.msra.mxu0 0
    %2948 = vmatprep.subr.bf16.mxu0 0
    %2949 = vmatpush2.bf16.msra.mxu0 0
    %2950 = vmatprep.subr.bf16.mxu0 0
    %2951 = vmatpush2.bf16.msra.mxu0 0
    %2952 = vmatprep.subr.bf16.mxu0 0
    %2953 = vmatpush2.bf16.msra.mxu0 0
    %2954 = vmatprep.mubr.bf16.mxu0 0
    %2955 = vmatmul.mubr.bf16.gmra.mxu0 %v2920
    %v2956 = vpop.f32.mrf.mxu0
    %v2957 = vadd.f32 %v2917, %v2956
    %v2958 = vpop.f32.mrf.mxu0
    %v2959 = vpop.f32.mrf.mxu0
    %v2960 = vpop.f32.mrf.mxu0
    %2961 = vdwg.mxu0
    %vm2962 = vcmask 122880
    %2963 = vst.msk [vmem:[#allocation3] sm:$0x1] %vm2962, %v2957
    // Predicated region
    $region54: #{tpu_custom_call.1} parent=1 // pred_check
      _
    $region55: #{tpu_custom_call.1} parent=1 // pred_check_branch
      %2965 = sbr.rel (0) target = $region57
    $region56: #{tpu_custom_call.1} parent=1 // pred_region
      %s2967 = ssub.s32 16, 16
      %2968 = vsyncadd [#allocation4], %s2967
      %s2970 = sshll.u32 [#allocation3], 4
      %s2971 = int_to_ptr.vmem [resolvable:$true] %s2970
      %2973 = dma.vmem_to_hbm [thread:$0]  %s2971, 16, %s13, [#allocation4]
    $region57: #{tpu_custom_call.1} parent=1 // pred_fallthru
      _
    // Predicated region
    $region58: #{tpu_custom_call.1} parent=1 // pred_check
      _
    $region59: #{tpu_custom_call.1} parent=1 // pred_check_branch
      %2975 = sbr.rel (0) target = $region61
    $region60: #{tpu_custom_call.1} parent=1 // pred_region
      %2976 = dma.done [#allocation4], 16
    $region61: #{tpu_custom_call.1} parent=1 // pred_fallthru
      _
    %2977 = vsyncpa [#allocation4], 1

</llo_original>
